<compile_context>
chip_gen: v6e
topology: v6e:2x2x1
jax: 0.10.0
libtpu: 0.0.40
codegen_flags: <defaults>
</compile_context>

<pallas_src>
import functools
import math

import jax
import jax.numpy as jnp
from jax import lax
from jax.experimental import pallas as pl
from jax.experimental.pallas import tpu as pltpu


# ----------------------------- in-kernel helpers -----------------------------

def _rmsnorm(x, w, eps):
    # x: (B, S, D) f32, w: (1, D) f32
    ms = jnp.mean(x * x, axis=-1, keepdims=True)
    return x * lax.rsqrt(ms + eps) * w


def _linear(x3d, w):
    # x3d: (B, S, Din) f32, w: (Din, Dout) bf16 -> (B, S, Dout) f32 (MXU, f32 acc)
    B, S, Din = x3d.shape
    y = jnp.dot(x3d.reshape(B * S, Din).astype(w.dtype), w,
                preferred_element_type=jnp.float32)
    return y.reshape(B, S, w.shape[-1])


# --------------------------------- kernel ------------------------------------

def fused_kernel(state0_ref, aemb_ref, ws_ref, fnorm_ref,
                 norms_ref, wqkv_ref, wo_ref, wg_ref, wu_ref, wfc2_ref,
                 states_ref, final_ref, x_scr, attn_scr,
                 *, num_heads, eps, weights_resident):
    it = pl.program_id(1)
    l = pl.program_id(2)
    last_it = pl.num_programs(1) - 1
    last_l = pl.num_programs(2) - 1
    # Resident weights: dynamic-index the full-L slab with the layer id.
    # Streamed weights: the per-layer slab was selected by the index_map -> index 0.
    widx = l if weights_resident else 0

    # Seed the carried state once per batch tile.
    @pl.when((it == 0) & (l == 0))
    def _():
        x_scr[...] = state0_ref[...]

    # Start of a recurrent iteration: record state (all_states), run adapter.
    @pl.when(l == 0)
    def _():
        cur = x_scr[...]
        states_ref[0] = cur
        # adapter(cat([state, emb], -1)) == state @ Ws + emb @ We  (bias-free).
        # The iteration-invariant emb @ We term is precomputed in the wrapper.
        x_scr[...] = _linear(cur, ws_ref[...]) + aemb_ref[...]

    # ---------------- SandwichTransformerBlock `l` ----------------
    x = x_scr[...]
    B, S, D = x.shape
    H = num_heads
    Dh = D // H
    scale = 1.0 / math.sqrt(Dh)

    norms = norms_ref[widx]                                 # (4, D)
    n1, n2, n3, n4 = norms[0:1], norms[1:2], norms[2:3], norms[3:4]

    # --- attention (sandwich norm), fused QKV projection ---
    residual = x
    xn = _rmsnorm(x, n1, eps)
    # Single full-width f32->bf16 cast of the fused QKV activations.
    qkv = _linear(xn, wqkv_ref[widx]).astype(jnp.bfloat16)  # (B, S, 3D)

    # Additive causal bias synthesized in-kernel (no (S,S) f32 input / VMEM slab).
    if S > 1:
        rows = lax.broadcasted_iota(jnp.int32, (S, S), 0)
        cols = lax.broadcasted_iota(jnp.int32, (S, S), 1)
        bias = jnp.where(cols > rows, -1e30, 0.0).astype(jnp.float32)[None]
    else:
        bias = jnp.zeros((1, 1, 1), jnp.float32)

    # Per-head static unroll (head_dim may be < 128; a head-batched 4-D
    # contraction needs relayouts Mosaic may not lower at small Dh, so the
    # proven per-head path is kept).  Head outputs land in a preallocated VMEM
    # slab instead of an H-way lane concatenate.
    # TODO(synk): flash-style KV tiling for long sequence lengths (scores are
    # currently materialized as a full (Bt, S, S) f32 tile per head).
    for h in range(H):
        qh = qkv[:, :, h * Dh:(h + 1) * Dh]
        kh = qkv[:, :, D + h * Dh:D + (h + 1) * Dh]
        vh = qkv[:, :, 2 * D + h * Dh:2 * D + (h + 1) * Dh]
        s = jnp.einsum('bqd,bkd->bqk', qh, kh,
                       preferred_element_type=jnp.float32) * scale + bias
        m = jnp.max(s, axis=-1, keepdims=True)
        e = jnp.exp(s - m)                                  # f32 elementwise (v5e-safe)
        p = e / jnp.sum(e, axis=-1, keepdims=True)          # exact softmax (no approx)
        attn_scr[:, :, h * Dh:(h + 1) * Dh] = jnp.einsum(
            'bqk,bkd->bqd', p.astype(jnp.bfloat16), vh,
            preferred_element_type=jnp.float32)

    attn = _linear(attn_scr[...], wo_ref[widx])
    x = _rmsnorm(residual + attn, n2, eps)

    # --- gated MLP (sandwich norm), split gate/up projections ---
    residual = x
    xn = _rmsnorm(x, n3, eps)
    gate = _linear(xn, wg_ref[widx])                        # (B, S, I)
    up = _linear(xn, wu_ref[widx])                          # (B, S, I)
    mlp = (gate * jax.nn.sigmoid(gate)) * up                # SiLU(gate) * value
    mlp = _linear(mlp, wfc2_ref[widx])                      # dropout p=0.0 -> identity
    x = _rmsnorm(residual + mlp, n4, eps)

    x_scr[...] = x

    # Last block of the last iteration: fused final RMSNorm -> output_state.
    @pl.when((it == last_it) & (l == last_l))
    def _():
        final_ref[...] = _rmsnorm(x, fnorm_ref[...], eps)


# --------------------------------- wrapper ------------------------------------

def recurrent_depth_forward(embedded_inputs, state, params, *,
                            num_iterations, num_heads, eps=1e-6, batch_tile=1,
                            weight_vmem_budget_bytes=40 << 20):
    B, S, D = embedded_inputs.shape
    L = params['wqkv'].shape[0]
    I = params['wg'].shape[-1]
    assert B % batch_tile == 0
    Bt = batch_tile
    # NOTE: keep B // Bt >= 2 where possible so v7x's two TensorCores both get
    # work along the leading "parallel" grid axis.  At real sizes pick Bt so
    # Bt*S is a multiple of 256 (v6e/v7x) or 128 (v5e) for MXU efficiency.

    # Hoist the iteration-invariant adapter term emb @ We (computed once by XLA;
    # removes one GEMM per recurrent iteration and the We weight from the kernel).
    we = params['adapter_we']
    adapter_emb = jnp.dot(
        embedded_inputs.reshape(B * S, D).astype(we.dtype), we,
        preferred_element_type=jnp.float32).reshape(B, S, D)

    # ----- weight residency / VMEM budgeting ---------------------------------
    weight_keys = ('norms', 'wqkv', 'wo', 'wg', 'wu', 'wfc2')
    weight_bytes = int(sum(params[k].size * params[k].dtype.itemsize
                           for k in weight_keys))
    per_layer_bytes = weight_bytes // L
    # Resident (constant-index) weights are fetched from HBM once per pallas_call
    # instead of once per (batch_tile, iteration).  Fall back to per-layer
    # streaming only when the full stack does not fit the budget.
    weights_resident = 2 * weight_bytes <= weight_vmem_budget_bytes

    act_f32 = Bt * S * D * 4
    tmp_bytes = (Bt * S * 3 * D * 4          # fused qkv activations
                 + Bt * S * S * 4            # per-head score tile
                 + 2 * Bt * S * I * 4)       # gate / up activations
    io_bytes = 2 * (2 * act_f32) + 2 * act_f32 + 2 * act_f32   # in/out blocks
    resident_w = 2 * (weight_bytes if weights_resident else per_layer_bytes)
    working = (resident_w + 2 * act_f32 + tmp_bytes + io_bytes
               + 2 * (D * D * 2 + D * 4))    # adapter Ws + final norm
    # Explicit scoped-VMEM limit (defaults are only 16/32 MiB); capped at 64 MiB
    # so the same plan is valid on v7x (64 MiB physical per TensorCore).
    vmem_limit = int(min(max(2 * working + (8 << 20), 32 << 20), 64 << 20))

    grid = (B // Bt, num_iterations, L)

    def const(shape):
        n = len(shape)
        return pl.BlockSpec(tuple(shape), lambda b, it, l: (0,) * n)

    def batch_blk():                         # batch-tiled activation, resident over it/l
        return pl.BlockSpec((Bt, S, D), lambda b, it, l: (b, 0, 0))

    def weight_blk(shape):
        n = len(shape)
        if weights_resident:                 # full-L slab, fetched once per call
            return pl.BlockSpec(tuple(shape), lambda b, it, l: (0,) * n)
        # streamed per-layer slab (double-buffered by the pipeline)
        return pl.BlockSpec((1,) + tuple(shape[1:]),
                            lambda b, it, l: (l,) + (0,) * (n - 1))

    in_specs = [
        batch_blk(),                              # initial state
        batch_blk(),                              # precomputed emb @ We
        const((D, D)),                            # adapter W (state half)
        const((1, D)),                            # final-norm weight
        weight_blk(params['norms'].shape),        # (L, 4, D)
        weight_blk(params['wqkv'].shape),         # (L, D, 3D)
        weight_blk(params['wo'].shape),           # (L, D, D)
        weight_blk(params['wg'].shape),           # (L, D, I)
        weight_blk(params['wu'].shape),           # (L, D, I)
        weight_blk(params['wfc2'].shape),         # (L, I, D)
    ]
    out_specs = [
        pl.BlockSpec((1, Bt, S, D), lambda b, it, l: (it, b, 0, 0)),   # all_states
        pl.BlockSpec((Bt, S, D), lambda b, it, l: (b, 0, 0)),          # final state
    ]

    call = pl.pallas_call(
        functools.partial(fused_kernel, num_heads=num_heads, eps=eps,
                          weights_resident=weights_resident),
        grid_spec=pltpu.PrefetchScalarGridSpec(
            num_scalar_prefetch=0,
            grid=grid,
            in_specs=in_specs,
            out_specs=out_specs,
            scratch_shapes=[pltpu.VMEM((Bt, S, D), jnp.float32),   # carried state
                            pltpu.VMEM((Bt, S, D), jnp.float32)],  # attn head slab
        ),
        out_shape=[
            jax.ShapeDtypeStruct((num_iterations, B, S, D), jnp.float32),
            jax.ShapeDtypeStruct((B, S, D), jnp.float32),
        ],
        compiler_params=pltpu.CompilerParams(
            dimension_semantics=("parallel", "arbitrary", "arbitrary"),
            vmem_limit_bytes=vmem_limit),
    )

    all_states, output_state = call(
        state, adapter_emb,
        params['adapter_ws'], params['final_norm_w'],
        params['norms'], params['wqkv'], params['wo'],
        params['wg'], params['wu'], params['wfc2'])

    # Glue: mirror the PyTorch module's Python `all_states` list
    # (state is appended BEFORE each iteration, so element 0 is the init state).
    # TODO(synk): adaptive-compute path (RecurrentKVCache sharing + per-token early
    # exit on ||state - prev_state||) is data-dependent host-side control flow and
    # is not implemented; this covers the default use_adaptive_compute=False forward.
    return output_state, [all_states[i] for i in range(num_iterations)]


# ---------------------------------- setup -------------------------------------

def make_params(key, hidden, intermediate, num_layers):
    D, I, L = hidden, intermediate, num_layers
    ks = jax.random.split(key, 7)

    def w(k, shape, fan_in):
        return jax.random.normal(k, shape, jnp.float32) / math.sqrt(fan_in)

    # PyTorch layouts: Linear.weight is (out_features, in_features)
    adapter_w = w(ks[0], (D, 2 * D), 2 * D)
    q = w(ks[1], (L, D, D), D)
    k_ = w(ks[2], (L, D, D), D)
    v = w(ks[3], (L, D, D), D)
    o = w(ks[4], (L, D, D), D)
    fc1 = w(ks[5], (L, 2 * I, D), D)                 # chunk(2): [:I]=gate, [I:]=value
    fc2 = w(ks[6], (L, D, I), I)

    to_in_out = lambda m: jnp.swapaxes(m, -1, -2)    # (out, in) -> (in, out)
    bf16 = lambda m: m.astype(jnp.bfloat16)

    wqkv = jnp.concatenate([to_in_out(q), to_in_out(k_), to_in_out(v)], axis=-1)

    return {
        # adapter acts on cat([state, emb]): first D input cols -> state half
        'adapter_ws': bf16(adapter_w[:, :D].T),      # (D, D) in (in, out)
        'adapter_we': bf16(adapter_w[:, D:].T),      # (D, D)
        'norms': jnp.ones((L, 4, D), jnp.float32),   # n1..n4 RMSNorm weights
        'wqkv': bf16(wqkv),                          # (L, D, 3D)
        'wo': bf16(to_in_out(o)),                    # (L, D, D)
        'wg': bf16(to_in_out(fc1[:, :I, :])),        # gate half  (L, D, I)
        'wu': bf16(to_in_out(fc1[:, I:, :])),        # value half (L, D, I)
        'wfc2': bf16(to_in_out(fc2)),                # (L, I, D)
        'final_norm_w': jnp.ones((1, D), jnp.float32),
    }


if __name__ == "__main__":
    B, S, D = 2, 8, 32          # batch, seq, hidden
    H, I, L = 4, 64, 2          # heads, intermediate, num_layers
    NUM_ITERS = 4
    STATE_INIT_STD = 0.4

    root = jax.random.PRNGKey(0)
    k_params, k_emb, k_state = jax.random.split(root, 3)

    params = make_params(k_params, D, I, L)
    embedded_inputs = jax.random.normal(k_emb, (B, S, D), jnp.float32)

    # initialize_state: clamp(randn, -3*std, 3*std) * std (deterministic via PRNGKey)
    state0 = jnp.clip(jax.random.normal(k_state, (B, S, D), jnp.float32),
                      -3 * STATE_INIT_STD, 3 * STATE_INIT_STD) * STATE_INIT_STD

    output_state, all_states = recurrent_depth_forward(
        embedded_inputs, state0, params,
        num_iterations=NUM_ITERS, num_heads=H)

    jax.block_until_ready(output_state)
    jax.block_until_ready(all_states)
    assert output_state.shape == (B, S, D)
    assert len(all_states) == NUM_ITERS
    assert all_states[0].shape == (B, S, D)
    assert bool(jnp.allclose(all_states[0], state0))     # state recorded pre-iteration
    assert bool(jnp.all(jnp.isfinite(output_state)))
    print("KERNEL_OK")
</pallas_src>

<mosaic_0001>
module attributes {stable_mosaic.version = 11 : i64} {
  func.func @fused_kernel(%arg0: i32, %arg1: i32, %arg2: i32, %arg3: memref<1x8x32xf32, #tpu.memory_space<vmem>>, %arg4: memref<1x8x32xf32, #tpu.memory_space<vmem>>, %arg5: memref<32x32xbf16, #tpu.memory_space<vmem>>, %arg6: memref<1x32xf32, #tpu.memory_space<vmem>>, %arg7: memref<2x4x32xf32, #tpu.memory_space<vmem>>, %arg8: memref<2x32x96xbf16, #tpu.memory_space<vmem>>, %arg9: memref<2x32x32xbf16, #tpu.memory_space<vmem>>, %arg10: memref<2x32x64xbf16, #tpu.memory_space<vmem>>, %arg11: memref<2x32x64xbf16, #tpu.memory_space<vmem>>, %arg12: memref<2x64x32xbf16, #tpu.memory_space<vmem>>, %arg13: memref<1x1x8x32xf32, #tpu.memory_space<vmem>>, %arg14: memref<1x8x32xf32, #tpu.memory_space<vmem>>, %arg15: memref<1x8x32xf32, #tpu.memory_space<vmem>>, %arg16: memref<1x8x32xf32, #tpu.memory_space<vmem>>) attributes {dimension_semantics = [#tpu.dimension_semantics<parallel>, #tpu.dimension_semantics<arbitrary>, #tpu.dimension_semantics<arbitrary>], iteration_bounds = array<i64: 2, 4, 2>, scalar_prefetch = 0 : i64, scratch_operands = 2 : i64, tpu.core_type = #tpu.core_type<tc>, window_params = [{transform_indices = @transform_0, window_bounds = array<i64: 1, 8, 32>}, {transform_indices = @transform_1, window_bounds = array<i64: 1, 8, 32>}, {pipeline_mode = #tpu.pipeline_mode<synchronous>, transform_indices = @transform_2, window_bounds = array<i64: 32, 32>}, {pipeline_mode = #tpu.pipeline_mode<synchronous>, transform_indices = @transform_3, window_bounds = array<i64: 1, 32>}, {pipeline_mode = #tpu.pipeline_mode<synchronous>, transform_indices = @transform_4, window_bounds = array<i64: 2, 4, 32>}, {pipeline_mode = #tpu.pipeline_mode<synchronous>, transform_indices = @transform_5, window_bounds = array<i64: 2, 32, 96>}, {pipeline_mode = #tpu.pipeline_mode<synchronous>, transform_indices = @transform_6, window_bounds = array<i64: 2, 32, 32>}, {pipeline_mode = #tpu.pipeline_mode<synchronous>, transform_indices = @transform_7, window_bounds = array<i64: 2, 32, 64>}, {pipeline_mode = #tpu.pipeline_mode<synchronous>, transform_indices = @transform_8, window_bounds = array<i64: 2, 32, 64>}, {pipeline_mode = #tpu.pipeline_mode<synchronous>, transform_indices = @transform_9, window_bounds = array<i64: 2, 64, 32>}, {transform_indices = @transform_10, window_bounds = array<i64: 1, 1, 8, 32>}, {transform_indices = @transform_11, window_bounds = array<i64: 1, 8, 32>}]} {
    %c0_i32 = arith.constant 0 : i32
    %0 = arith.cmpi eq, %arg1, %c0_i32 : i32
    %c0_i32_0 = arith.constant 0 : i32
    %1 = arith.cmpi eq, %arg2, %c0_i32_0 : i32
    %2 = arith.andi %0, %1 : i1
    %3 = arith.extui %2 : i1 to i32
    %c0_i32_1 = arith.constant 0 : i32
    %4 = arith.cmpi ne, %3, %c0_i32_1 : i32
    scf.if %4 {
      %c0_73 = arith.constant 0 : index
      %c0_74 = arith.constant 0 : index
      %c0_75 = arith.constant 0 : index
      %203 = vector.load %arg3[%c0_73, %c0_74, %c0_75] : memref<1x8x32xf32, #tpu.memory_space<vmem>>, vector<1x8x32xf32>
      %c0_76 = arith.constant 0 : index
      %c0_77 = arith.constant 0 : index
      %c0_78 = arith.constant 0 : index
      %204 = vector.load %arg15[%c0_76, %c0_77, %c0_78] : memref<1x8x32xf32, #tpu.memory_space<vmem>>, vector<1x8x32xf32>
      tpu.vector_store %arg15[%c0_76, %c0_77, %c0_78], %203 {strides = array<i32>} : memref<1x8x32xf32, #tpu.memory_space<vmem>>, vector<1x8x32xf32>,
    } else {
    }
    %c0_i32_2 = arith.constant 0 : i32
    %5 = arith.cmpi eq, %arg2, %c0_i32_2 : i32
    %6 = arith.extui %5 : i1 to i32
    %c0_i32_3 = arith.constant 0 : i32
    %7 = arith.cmpi ne, %6, %c0_i32_3 : i32
    scf.if %7 {
      %c0_73 = arith.constant 0 : index
      %c0_74 = arith.constant 0 : index
      %c0_75 = arith.constant 0 : index
      %203 = vector.load %arg15[%c0_73, %c0_74, %c0_75] : memref<1x8x32xf32, #tpu.memory_space<vmem>>, vector<1x8x32xf32>
      %c0_76 = arith.constant 0 : index
      %c0_77 = arith.constant 0 : index
      %c0_78 = arith.constant 0 : index
      %c0_79 = arith.constant 0 : index
      %204 = vector.load %arg13[%c0_76, %c0_77, %c0_78, %c0_79] : memref<1x1x8x32xf32, #tpu.memory_space<vmem>>, vector<1x1x8x32xf32>
      %205 = vector.shape_cast %204 : vector<1x1x8x32xf32> to vector<1x8x32xf32>
      %206 = vector.shape_cast %203 : vector<1x8x32xf32> to vector<1x1x8x32xf32>
      tpu.vector_store %arg13[%c0_76, %c0_77, %c0_78, %c0_79], %206 {strides = array<i32>} : memref<1x1x8x32xf32, #tpu.memory_space<vmem>>, vector<1x1x8x32xf32>,
      %c0_80 = arith.constant 0 : index
      %c0_81 = arith.constant 0 : index
      %207 = vector.load %arg5[%c0_80, %c0_81] : memref<32x32xbf16, #tpu.memory_space<vmem>>, vector<32x32xbf16>
      %208 = vector.shape_cast %203 : vector<1x8x32xf32> to vector<8x32xf32>
      %209 = arith.truncf %208 : vector<8x32xf32> to vector<8x32xbf16>
      %cst_82 = arith.constant dense<0.000000e+00> : vector<8x32xf32>
      %210 = tpu.matmul %209, %207, %cst_82 {dimension_numbers = #tpu.dot_dimension_numbers<[1], [0], [0], [1], [0, 0, 1, 1], [], []>} : vector<8x32xbf16>, vector<32x32xbf16>, vector<8x32xf32> -> vector<8x32xf32>
      %211 = vector.shape_cast %210 : vector<8x32xf32> to vector<1x8x32xf32>
      %c0_83 = arith.constant 0 : index
      %c0_84 = arith.constant 0 : index
      %c0_85 = arith.constant 0 : index
      %212 = vector.load %arg4[%c0_83, %c0_84, %c0_85] : memref<1x8x32xf32, #tpu.memory_space<vmem>>, vector<1x8x32xf32>
      %213 = arith.addf %211, %212 : vector<1x8x32xf32>
      %c0_86 = arith.constant 0 : index
      %c0_87 = arith.constant 0 : index
      %c0_88 = arith.constant 0 : index
      %214 = vector.load %arg15[%c0_86, %c0_87, %c0_88] : memref<1x8x32xf32, #tpu.memory_space<vmem>>, vector<1x8x32xf32>
      tpu.vector_store %arg15[%c0_86, %c0_87, %c0_88], %213 {strides = array<i32>} : memref<1x8x32xf32, #tpu.memory_space<vmem>>, vector<1x8x32xf32>,
    } else {
    }
    %c0 = arith.constant 0 : index
    %c0_4 = arith.constant 0 : index
    %c0_5 = arith.constant 0 : index
    %8 = vector.load %arg15[%c0, %c0_4, %c0_5] : memref<1x8x32xf32, #tpu.memory_space<vmem>>, vector<1x8x32xf32>
    %9 = arith.index_cast %arg2 : i32 to index
    %c0_6 = arith.constant 0 : index
    %c0_7 = arith.constant 0 : index
    %10 = vector.load %arg7[%9, %c0_6, %c0_7] : memref<2x4x32xf32, #tpu.memory_space<vmem>>, vector<1x4x32xf32>
    %11 = vector.shape_cast %10 : vector<1x4x32xf32> to vector<4x32xf32>
    %12 = vector.extract_strided_slice %11 {offsets = [0, 0], sizes = [1, 32], strides = [1, 1]} : vector<4x32xf32> to vector<1x32xf32>
    %13 = vector.extract_strided_slice %11 {offsets = [1, 0], sizes = [1, 32], strides = [1, 1]} : vector<4x32xf32> to vector<1x32xf32>
    %14 = vector.extract_strided_slice %11 {offsets = [2, 0], sizes = [1, 32], strides = [1, 1]} : vector<4x32xf32> to vector<1x32xf32>
    %15 = vector.extract_strided_slice %11 {offsets = [3, 0], sizes = [1, 32], strides = [1, 1]} : vector<4x32xf32> to vector<1x32xf32>
    %16 = arith.mulf %8, %8 : vector<1x8x32xf32>
    %cst = arith.constant dense<0.000000e+00> : vector<1x8xf32>
    %17 = vector.multi_reduction <add>, %16, %cst [2] : vector<1x8x32xf32> to vector<1x8xf32>
    %18 = vector.shape_cast %17 : vector<1x8xf32> to vector<1x8x1xf32>
    %cst_8 = arith.constant 3.200000e+01 : f32
    %19 = vector.broadcast %cst_8 : f32 to vector<1x8x1xf32>
    %20 = arith.divf %18, %19 : vector<1x8x1xf32>
    %cst_9 = arith.constant 9.99999997E-7 : f32
    %21 = vector.broadcast %cst_9 : f32 to vector<1x8x1xf32>
    %22 = arith.addf %20, %21 : vector<1x8x1xf32>
    %23 = math.rsqrt %22 : vector<1x8x1xf32>
    %24 = vector.broadcast %23 : vector<1x8x1xf32> to vector<1x8x32xf32>
    %25 = arith.mulf %8, %24 : vector<1x8x32xf32>
    %26 = vector.shape_cast %12 : vector<1x32xf32> to vector<1x1x32xf32>
    %27 = vector.broadcast %26 : vector<1x1x32xf32> to vector<1x8x32xf32>
    %28 = arith.mulf %25, %27 : vector<1x8x32xf32>
    %29 = arith.index_cast %arg2 : i32 to index
    %c0_10 = arith.constant 0 : index
    %c0_11 = arith.constant 0 : index
    %30 = vector.load %arg8[%29, %c0_10, %c0_11] : memref<2x32x96xbf16, #tpu.memory_space<vmem>>, vector<1x32x96xbf16>
    %31 = vector.shape_cast %30 : vector<1x32x96xbf16> to vector<32x96xbf16>
    %32 = vector.shape_cast %28 : vector<1x8x32xf32> to vector<8x32xf32>
    %33 = arith.truncf %32 : vector<8x32xf32> to vector<8x32xbf16>
    %cst_12 = arith.constant dense<0.000000e+00> : vector<8x96xf32>
    %34 = tpu.matmul %33, %31, %cst_12 {dimension_numbers = #tpu.dot_dimension_numbers<[1], [0], [0], [1], [0, 0, 1, 1], [], []>} : vector<8x32xbf16>, vector<32x96xbf16>, vector<8x96xf32> -> vector<8x96xf32>
    %35 = vector.shape_cast %34 : vector<8x96xf32> to vector<1x8x96xf32>
    %36 = arith.truncf %35 : vector<1x8x96xf32> to vector<1x8x96xbf16>
    %37 = tpu.iota {dimensions = array<i32: 0>} : vector<8x8xi32>
    %38 = tpu.iota {dimensions = array<i32: 1>} : vector<8x8xi32>
    %39 = arith.cmpi sgt, %38, %37 : vector<8x8xi32>
    %cst_13 = arith.constant -1.000000e+30 : f32
    %cst_14 = arith.constant 0.000000e+00 : f32
    %40 = vector.broadcast %cst_13 : f32 to vector<8x8xf32>
    %41 = vector.broadcast %cst_14 : f32 to vector<8x8xf32>
    %42 = arith.select %39, %40, %41 : vector<8x8xi1>, vector<8x8xf32>
    %43 = vector.shape_cast %42 : vector<8x8xf32> to vector<1x8x8xf32>
    %44 = vector.extract_strided_slice %36 {offsets = [0, 0, 0], sizes = [1, 8, 8], strides = [1, 1, 1]} : vector<1x8x96xbf16> to vector<1x8x8xbf16>
    %45 = vector.extract_strided_slice %36 {offsets = [0, 0, 32], sizes = [1, 8, 8], strides = [1, 1, 1]} : vector<1x8x96xbf16> to vector<1x8x8xbf16>
    %46 = vector.extract_strided_slice %36 {offsets = [0, 0, 64], sizes = [1, 8, 8], strides = [1, 1, 1]} : vector<1x8x96xbf16> to vector<1x8x8xbf16>
    "tpu.trace_start"() <{level = 10 : i32, message = "bqd,bkd->bqk"}> : () -> ()
    %cst_15 = arith.constant dense<0.000000e+00> : vector<1x8x8xf32>
    %47 = tpu.matmul %44, %45, %cst_15 {dimension_numbers = #tpu.dot_dimension_numbers<[2], [2], [1], [1], [0, 0, 0, 1, 1, 1], [0], [0]>} : vector<1x8x8xbf16>, vector<1x8x8xbf16>, vector<1x8x8xf32> -> vector<1x8x8xf32>
    "tpu.trace_stop"() : () -> ()
    %cst_16 = arith.constant 0.353553385 : f32
    %48 = vector.broadcast %cst_16 : f32 to vector<1x8x8xf32>
    %49 = arith.mulf %47, %48 : vector<1x8x8xf32>
    %50 = arith.addf %49, %43 : vector<1x8x8xf32>
    %cst_17 = arith.constant dense<0xFF800000> : vector<1x8xf32>
    %51 = vector.multi_reduction <maximumf>, %50, %cst_17 [2] : vector<1x8x8xf32> to vector<1x8xf32>
    %52 = vector.shape_cast %51 : vector<1x8xf32> to vector<1x8x1xf32>
    %53 = vector.broadcast %52 : vector<1x8x1xf32> to vector<1x8x8xf32>
    %54 = arith.subf %50, %53 : vector<1x8x8xf32>
    %55 = math.exp %54 : vector<1x8x8xf32>
    %cst_18 = arith.constant dense<0.000000e+00> : vector<1x8xf32>
    %56 = vector.multi_reduction <add>, %55, %cst_18 [2] : vector<1x8x8xf32> to vector<1x8xf32>
    %57 = vector.shape_cast %56 : vector<1x8xf32> to vector<1x8x1xf32>
    %58 = vector.broadcast %57 : vector<1x8x1xf32> to vector<1x8x8xf32>
    %59 = arith.divf %55, %58 : vector<1x8x8xf32>
    %60 = arith.truncf %59 : vector<1x8x8xf32> to vector<1x8x8xbf16>
    "tpu.trace_start"() <{level = 10 : i32, message = "bqk,bkd->bqd"}> : () -> ()
    %cst_19 = arith.constant dense<0.000000e+00> : vector<1x8x8xf32>
    %61 = tpu.matmul %60, %46, %cst_19 {dimension_numbers = #tpu.dot_dimension_numbers<[2], [1], [1], [2], [0, 0, 0, 1, 1, 2], [0], [0]>} : vector<1x8x8xbf16>, vector<1x8x8xbf16>, vector<1x8x8xf32> -> vector<1x8x8xf32>
    "tpu.trace_stop"() : () -> ()
    %c0_20 = arith.constant 0 : index
    %c0_21 = arith.constant 0 : index
    %c0_22 = arith.constant 0 : index
    %62 = vector.load %arg16[%c0_20, %c0_21, %c0_22] : memref<1x8x32xf32, #tpu.memory_space<vmem>>, vector<1x8x8xf32>
    tpu.vector_store %arg16[%c0_20, %c0_21, %c0_22], %61 {strides = array<i32>} : memref<1x8x32xf32, #tpu.memory_space<vmem>>, vector<1x8x8xf32>,
    %63 = vector.extract_strided_slice %36 {offsets = [0, 0, 8], sizes = [1, 8, 8], strides = [1, 1, 1]} : vector<1x8x96xbf16> to vector<1x8x8xbf16>
    %64 = vector.extract_strided_slice %36 {offsets = [0, 0, 40], sizes = [1, 8, 8], strides = [1, 1, 1]} : vector<1x8x96xbf16> to vector<1x8x8xbf16>
    %65 = vector.extract_strided_slice %36 {offsets = [0, 0, 72], sizes = [1, 8, 8], strides = [1, 1, 1]} : vector<1x8x96xbf16> to vector<1x8x8xbf16>
    "tpu.trace_start"() <{level = 10 : i32, message = "bqd,bkd->bqk"}> : () -> ()
    %cst_23 = arith.constant dense<0.000000e+00> : vector<1x8x8xf32>
    %66 = tpu.matmul %63, %64, %cst_23 {dimension_numbers = #tpu.dot_dimension_numbers<[2], [2], [1], [1], [0, 0, 0, 1, 1, 1], [0], [0]>} : vector<1x8x8xbf16>, vector<1x8x8xbf16>, vector<1x8x8xf32> -> vector<1x8x8xf32>
    "tpu.trace_stop"() : () -> ()
    %cst_24 = arith.constant 0.353553385 : f32
    %67 = vector.broadcast %cst_24 : f32 to vector<1x8x8xf32>
    %68 = arith.mulf %66, %67 : vector<1x8x8xf32>
    %69 = arith.addf %68, %43 : vector<1x8x8xf32>
    %cst_25 = arith.constant dense<0xFF800000> : vector<1x8xf32>
    %70 = vector.multi_reduction <maximumf>, %69, %cst_25 [2] : vector<1x8x8xf32> to vector<1x8xf32>
    %71 = vector.shape_cast %70 : vector<1x8xf32> to vector<1x8x1xf32>
    %72 = vector.broadcast %71 : vector<1x8x1xf32> to vector<1x8x8xf32>
    %73 = arith.subf %69, %72 : vector<1x8x8xf32>
    %74 = math.exp %73 : vector<1x8x8xf32>
    %cst_26 = arith.constant dense<0.000000e+00> : vector<1x8xf32>
    %75 = vector.multi_reduction <add>, %74, %cst_26 [2] : vector<1x8x8xf32> to vector<1x8xf32>
    %76 = vector.shape_cast %75 : vector<1x8xf32> to vector<1x8x1xf32>
    %77 = vector.broadcast %76 : vector<1x8x1xf32> to vector<1x8x8xf32>
    %78 = arith.divf %74, %77 : vector<1x8x8xf32>
    %79 = arith.truncf %78 : vector<1x8x8xf32> to vector<1x8x8xbf16>
    "tpu.trace_start"() <{level = 10 : i32, message = "bqk,bkd->bqd"}> : () -> ()
    %cst_27 = arith.constant dense<0.000000e+00> : vector<1x8x8xf32>
    %80 = tpu.matmul %79, %65, %cst_27 {dimension_numbers = #tpu.dot_dimension_numbers<[2], [1], [1], [2], [0, 0, 0, 1, 1, 2], [0], [0]>} : vector<1x8x8xbf16>, vector<1x8x8xbf16>, vector<1x8x8xf32> -> vector<1x8x8xf32>
    "tpu.trace_stop"() : () -> ()
    %c0_28 = arith.constant 0 : index
    %c0_29 = arith.constant 0 : index
    %c8 = arith.constant 8 : index
    %81 = vector.load %arg16[%c0_28, %c0_29, %c8] : memref<1x8x32xf32, #tpu.memory_space<vmem>>, vector<1x8x8xf32>
    tpu.vector_store %arg16[%c0_28, %c0_29, %c8], %80 {strides = array<i32>} : memref<1x8x32xf32, #tpu.memory_space<vmem>>, vector<1x8x8xf32>,
    %82 = vector.extract_strided_slice %36 {offsets = [0, 0, 16], sizes = [1, 8, 8], strides = [1, 1, 1]} : vector<1x8x96xbf16> to vector<1x8x8xbf16>
    %83 = vector.extract_strided_slice %36 {offsets = [0, 0, 48], sizes = [1, 8, 8], strides = [1, 1, 1]} : vector<1x8x96xbf16> to vector<1x8x8xbf16>
    %84 = vector.extract_strided_slice %36 {offsets = [0, 0, 80], sizes = [1, 8, 8], strides = [1, 1, 1]} : vector<1x8x96xbf16> to vector<1x8x8xbf16>
    "tpu.trace_start"() <{level = 10 : i32, message = "bqd,bkd->bqk"}> : () -> ()
    %cst_30 = arith.constant dense<0.000000e+00> : vector<1x8x8xf32>
    %85 = tpu.matmul %82, %83, %cst_30 {dimension_numbers = #tpu.dot_dimension_numbers<[2], [2], [1], [1], [0, 0, 0, 1, 1, 1], [0], [0]>} : vector<1x8x8xbf16>, vector<1x8x8xbf16>, vector<1x8x8xf32> -> vector<1x8x8xf32>
    "tpu.trace_stop"() : () -> ()
    %cst_31 = arith.constant 0.353553385 : f32
    %86 = vector.broadcast %cst_31 : f32 to vector<1x8x8xf32>
    %87 = arith.mulf %85, %86 : vector<1x8x8xf32>
    %88 = arith.addf %87, %43 : vector<1x8x8xf32>
    %cst_32 = arith.constant dense<0xFF800000> : vector<1x8xf32>
    %89 = vector.multi_reduction <maximumf>, %88, %cst_32 [2] : vector<1x8x8xf32> to vector<1x8xf32>
    %90 = vector.shape_cast %89 : vector<1x8xf32> to vector<1x8x1xf32>
    %91 = vector.broadcast %90 : vector<1x8x1xf32> to vector<1x8x8xf32>
    %92 = arith.subf %88, %91 : vector<1x8x8xf32>
    %93 = math.exp %92 : vector<1x8x8xf32>
    %cst_33 = arith.constant dense<0.000000e+00> : vector<1x8xf32>
    %94 = vector.multi_reduction <add>, %93, %cst_33 [2] : vector<1x8x8xf32> to vector<1x8xf32>
    %95 = vector.shape_cast %94 : vector<1x8xf32> to vector<1x8x1xf32>
    %96 = vector.broadcast %95 : vector<1x8x1xf32> to vector<1x8x8xf32>
    %97 = arith.divf %93, %96 : vector<1x8x8xf32>
    %98 = arith.truncf %97 : vector<1x8x8xf32> to vector<1x8x8xbf16>
    "tpu.trace_start"() <{level = 10 : i32, message = "bqk,bkd->bqd"}> : () -> ()
    %cst_34 = arith.constant dense<0.000000e+00> : vector<1x8x8xf32>
    %99 = tpu.matmul %98, %84, %cst_34 {dimension_numbers = #tpu.dot_dimension_numbers<[2], [1], [1], [2], [0, 0, 0, 1, 1, 2], [0], [0]>} : vector<1x8x8xbf16>, vector<1x8x8xbf16>, vector<1x8x8xf32> -> vector<1x8x8xf32>
    "tpu.trace_stop"() : () -> ()
    %c0_35 = arith.constant 0 : index
    %c0_36 = arith.constant 0 : index
    %c16 = arith.constant 16 : index
    %100 = vector.load %arg16[%c0_35, %c0_36, %c16] : memref<1x8x32xf32, #tpu.memory_space<vmem>>, vector<1x8x8xf32>
    tpu.vector_store %arg16[%c0_35, %c0_36, %c16], %99 {strides = array<i32>} : memref<1x8x32xf32, #tpu.memory_space<vmem>>, vector<1x8x8xf32>,
    %101 = vector.extract_strided_slice %36 {offsets = [0, 0, 24], sizes = [1, 8, 8], strides = [1, 1, 1]} : vector<1x8x96xbf16> to vector<1x8x8xbf16>
    %102 = vector.extract_strided_slice %36 {offsets = [0, 0, 56], sizes = [1, 8, 8], strides = [1, 1, 1]} : vector<1x8x96xbf16> to vector<1x8x8xbf16>
    %103 = vector.extract_strided_slice %36 {offsets = [0, 0, 88], sizes = [1, 8, 8], strides = [1, 1, 1]} : vector<1x8x96xbf16> to vector<1x8x8xbf16>
    "tpu.trace_start"() <{level = 10 : i32, message = "bqd,bkd->bqk"}> : () -> ()
    %cst_37 = arith.constant dense<0.000000e+00> : vector<1x8x8xf32>
    %104 = tpu.matmul %101, %102, %cst_37 {dimension_numbers = #tpu.dot_dimension_numbers<[2], [2], [1], [1], [0, 0, 0, 1, 1, 1], [0], [0]>} : vector<1x8x8xbf16>, vector<1x8x8xbf16>, vector<1x8x8xf32> -> vector<1x8x8xf32>
    "tpu.trace_stop"() : () -> ()
    %cst_38 = arith.constant 0.353553385 : f32
    %105 = vector.broadcast %cst_38 : f32 to vector<1x8x8xf32>
    %106 = arith.mulf %104, %105 : vector<1x8x8xf32>
    %107 = arith.addf %106, %43 : vector<1x8x8xf32>
    %cst_39 = arith.constant dense<0xFF800000> : vector<1x8xf32>
    %108 = vector.multi_reduction <maximumf>, %107, %cst_39 [2] : vector<1x8x8xf32> to vector<1x8xf32>
    %109 = vector.shape_cast %108 : vector<1x8xf32> to vector<1x8x1xf32>
    %110 = vector.broadcast %109 : vector<1x8x1xf32> to vector<1x8x8xf32>
    %111 = arith.subf %107, %110 : vector<1x8x8xf32>
    %112 = math.exp %111 : vector<1x8x8xf32>
    %cst_40 = arith.constant dense<0.000000e+00> : vector<1x8xf32>
    %113 = vector.multi_reduction <add>, %112, %cst_40 [2] : vector<1x8x8xf32> to vector<1x8xf32>
    %114 = vector.shape_cast %113 : vector<1x8xf32> to vector<1x8x1xf32>
    %115 = vector.broadcast %114 : vector<1x8x1xf32> to vector<1x8x8xf32>
    %116 = arith.divf %112, %115 : vector<1x8x8xf32>
    %117 = arith.truncf %116 : vector<1x8x8xf32> to vector<1x8x8xbf16>
    "tpu.trace_start"() <{level = 10 : i32, message = "bqk,bkd->bqd"}> : () -> ()
    %cst_41 = arith.constant dense<0.000000e+00> : vector<1x8x8xf32>
    %118 = tpu.matmul %117, %103, %cst_41 {dimension_numbers = #tpu.dot_dimension_numbers<[2], [1], [1], [2], [0, 0, 0, 1, 1, 2], [0], [0]>} : vector<1x8x8xbf16>, vector<1x8x8xbf16>, vector<1x8x8xf32> -> vector<1x8x8xf32>
    "tpu.trace_stop"() : () -> ()
    %c0_42 = arith.constant 0 : index
    %c0_43 = arith.constant 0 : index
    %c24 = arith.constant 24 : index
    %119 = vector.load %arg16[%c0_42, %c0_43, %c24] : memref<1x8x32xf32, #tpu.memory_space<vmem>>, vector<1x8x8xf32>
    tpu.vector_store %arg16[%c0_42, %c0_43, %c24], %118 {strides = array<i32>} : memref<1x8x32xf32, #tpu.memory_space<vmem>>, vector<1x8x8xf32>,
    %c0_44 = arith.constant 0 : index
    %c0_45 = arith.constant 0 : index
    %c0_46 = arith.constant 0 : index
    %120 = vector.load %arg16[%c0_44, %c0_45, %c0_46] : memref<1x8x32xf32, #tpu.memory_space<vmem>>, vector<1x8x32xf32>
    %121 = arith.index_cast %arg2 : i32 to index
    %c0_47 = arith.constant 0 : index
    %c0_48 = arith.constant 0 : index
    %122 = vector.load %arg9[%121, %c0_47, %c0_48] : memref<2x32x32xbf16, #tpu.memory_space<vmem>>, vector<1x32x32xbf16>
    %123 = vector.shape_cast %122 : vector<1x32x32xbf16> to vector<32x32xbf16>
    %124 = vector.shape_cast %120 : vector<1x8x32xf32> to vector<8x32xf32>
    %125 = arith.truncf %124 : vector<8x32xf32> to vector<8x32xbf16>
    %cst_49 = arith.constant dense<0.000000e+00> : vector<8x32xf32>
    %126 = tpu.matmul %125, %123, %cst_49 {dimension_numbers = #tpu.dot_dimension_numbers<[1], [0], [0], [1], [0, 0, 1, 1], [], []>} : vector<8x32xbf16>, vector<32x32xbf16>, vector<8x32xf32> -> vector<8x32xf32>
    %127 = vector.shape_cast %126 : vector<8x32xf32> to vector<1x8x32xf32>
    %128 = arith.addf %8, %127 : vector<1x8x32xf32>
    %129 = arith.mulf %128, %128 : vector<1x8x32xf32>
    %cst_50 = arith.constant dense<0.000000e+00> : vector<1x8xf32>
    %130 = vector.multi_reduction <add>, %129, %cst_50 [2] : vector<1x8x32xf32> to vector<1x8xf32>
    %131 = vector.shape_cast %130 : vector<1x8xf32> to vector<1x8x1xf32>
    %cst_51 = arith.constant 3.200000e+01 : f32
    %132 = vector.broadcast %cst_51 : f32 to vector<1x8x1xf32>
    %133 = arith.divf %131, %132 : vector<1x8x1xf32>
    %cst_52 = arith.constant 9.99999997E-7 : f32
    %134 = vector.broadcast %cst_52 : f32 to vector<1x8x1xf32>
    %135 = arith.addf %133, %134 : vector<1x8x1xf32>
    %136 = math.rsqrt %135 : vector<1x8x1xf32>
    %137 = vector.broadcast %136 : vector<1x8x1xf32> to vector<1x8x32xf32>
    %138 = arith.mulf %128, %137 : vector<1x8x32xf32>
    %139 = vector.shape_cast %13 : vector<1x32xf32> to vector<1x1x32xf32>
    %140 = vector.broadcast %139 : vector<1x1x32xf32> to vector<1x8x32xf32>
    %141 = arith.mulf %138, %140 : vector<1x8x32xf32>
    %142 = arith.mulf %141, %141 : vector<1x8x32xf32>
    %cst_53 = arith.constant dense<0.000000e+00> : vector<1x8xf32>
    %143 = vector.multi_reduction <add>, %142, %cst_53 [2] : vector<1x8x32xf32> to vector<1x8xf32>
    %144 = vector.shape_cast %143 : vector<1x8xf32> to vector<1x8x1xf32>
    %cst_54 = arith.constant 3.200000e+01 : f32
    %145 = vector.broadcast %cst_54 : f32 to vector<1x8x1xf32>
    %146 = arith.divf %144, %145 : vector<1x8x1xf32>
    %cst_55 = arith.constant 9.99999997E-7 : f32
    %147 = vector.broadcast %cst_55 : f32 to vector<1x8x1xf32>
    %148 = arith.addf %146, %147 : vector<1x8x1xf32>
    %149 = math.rsqrt %148 : vector<1x8x1xf32>
    %150 = vector.broadcast %149 : vector<1x8x1xf32> to vector<1x8x32xf32>
    %151 = arith.mulf %141, %150 : vector<1x8x32xf32>
    %152 = vector.shape_cast %14 : vector<1x32xf32> to vector<1x1x32xf32>
    %153 = vector.broadcast %152 : vector<1x1x32xf32> to vector<1x8x32xf32>
    %154 = arith.mulf %151, %153 : vector<1x8x32xf32>
    %155 = arith.index_cast %arg2 : i32 to index
    %c0_56 = arith.constant 0 : index
    %c0_57 = arith.constant 0 : index
    %156 = vector.load %arg10[%155, %c0_56, %c0_57] : memref<2x32x64xbf16, #tpu.memory_space<vmem>>, vector<1x32x64xbf16>
    %157 = vector.shape_cast %156 : vector<1x32x64xbf16> to vector<32x64xbf16>
    %158 = vector.shape_cast %154 : vector<1x8x32xf32> to vector<8x32xf32>
    %159 = arith.truncf %158 : vector<8x32xf32> to vector<8x32xbf16>
    %cst_58 = arith.constant dense<0.000000e+00> : vector<8x64xf32>
    %160 = tpu.matmul %159, %157, %cst_58 {dimension_numbers = #tpu.dot_dimension_numbers<[1], [0], [0], [1], [0, 0, 1, 1], [], []>} : vector<8x32xbf16>, vector<32x64xbf16>, vector<8x64xf32> -> vector<8x64xf32>
    %161 = vector.shape_cast %160 : vector<8x64xf32> to vector<1x8x64xf32>
    %162 = arith.index_cast %arg2 : i32 to index
    %c0_59 = arith.constant 0 : index
    %c0_60 = arith.constant 0 : index
    %163 = vector.load %arg11[%162, %c0_59, %c0_60] : memref<2x32x64xbf16, #tpu.memory_space<vmem>>, vector<1x32x64xbf16>
    %164 = vector.shape_cast %163 : vector<1x32x64xbf16> to vector<32x64xbf16>
    %165 = vector.shape_cast %154 : vector<1x8x32xf32> to vector<8x32xf32>
    %166 = arith.truncf %165 : vector<8x32xf32> to vector<8x32xbf16>
    %cst_61 = arith.constant dense<0.000000e+00> : vector<8x64xf32>
    %167 = tpu.matmul %166, %164, %cst_61 {dimension_numbers = #tpu.dot_dimension_numbers<[1], [0], [0], [1], [0, 0, 1, 1], [], []>} : vector<8x32xbf16>, vector<32x64xbf16>, vector<8x64xf32> -> vector<8x64xf32>
    %168 = vector.shape_cast %167 : vector<8x64xf32> to vector<1x8x64xf32>
    %169 = arith.negf %161 : vector<1x8x64xf32>
    %170 = math.exp %169 : vector<1x8x64xf32>
    %cst_62 = arith.constant 1.000000e+00 : f32
    %171 = vector.broadcast %cst_62 : f32 to vector<1x8x64xf32>
    %172 = arith.addf %171, %170 : vector<1x8x64xf32>
    %173 = arith.divf %171, %172 : vector<1x8x64xf32>
    %174 = arith.mulf %161, %173 : vector<1x8x64xf32>
    %175 = arith.mulf %174, %168 : vector<1x8x64xf32>
    %176 = arith.index_cast %arg2 : i32 to index
    %c0_63 = arith.constant 0 : index
    %c0_64 = arith.constant 0 : index
    %177 = vector.load %arg12[%176, %c0_63, %c0_64] : memref<2x64x32xbf16, #tpu.memory_space<vmem>>, vector<1x64x32xbf16>
    %178 = vector.shape_cast %177 : vector<1x64x32xbf16> to vector<64x32xbf16>
    %179 = vector.shape_cast %175 : vector<1x8x64xf32> to vector<8x64xf32>
    %180 = arith.truncf %179 : vector<8x64xf32> to vector<8x64xbf16>
    %cst_65 = arith.constant dense<0.000000e+00> : vector<8x32xf32>
    %181 = tpu.matmul %180, %178, %cst_65 {dimension_numbers = #tpu.dot_dimension_numbers<[1], [0], [0], [1], [0, 0, 1, 1], [], []>} : vector<8x64xbf16>, vector<64x32xbf16>, vector<8x32xf32> -> vector<8x32xf32>
    %182 = vector.shape_cast %181 : vector<8x32xf32> to vector<1x8x32xf32>
    %183 = arith.addf %141, %182 : vector<1x8x32xf32>
    %184 = arith.mulf %183, %183 : vector<1x8x32xf32>
    %cst_66 = arith.constant dense<0.000000e+00> : vector<1x8xf32>
    %185 = vector.multi_reduction <add>, %184, %cst_66 [2] : vector<1x8x32xf32> to vector<1x8xf32>
    %186 = vector.shape_cast %185 : vector<1x8xf32> to vector<1x8x1xf32>
    %cst_67 = arith.constant 3.200000e+01 : f32
    %187 = vector.broadcast %cst_67 : f32 to vector<1x8x1xf32>
    %188 = arith.divf %186, %187 : vector<1x8x1xf32>
    %cst_68 = arith.constant 9.99999997E-7 : f32
    %189 = vector.broadcast %cst_68 : f32 to vector<1x8x1xf32>
    %190 = arith.addf %188, %189 : vector<1x8x1xf32>
    %191 = math.rsqrt %190 : vector<1x8x1xf32>
    %192 = vector.broadcast %191 : vector<1x8x1xf32> to vector<1x8x32xf32>
    %193 = arith.mulf %183, %192 : vector<1x8x32xf32>
    %194 = vector.shape_cast %15 : vector<1x32xf32> to vector<1x1x32xf32>
    %195 = vector.broadcast %194 : vector<1x1x32xf32> to vector<1x8x32xf32>
    %196 = arith.mulf %193, %195 : vector<1x8x32xf32>
    %c0_69 = arith.constant 0 : index
    %c0_70 = arith.constant 0 : index
    %c0_71 = arith.constant 0 : index
    %197 = vector.load %arg15[%c0_69, %c0_70, %c0_71] : memref<1x8x32xf32, #tpu.memory_space<vmem>>, vector<1x8x32xf32>
    tpu.vector_store %arg15[%c0_69, %c0_70, %c0_71], %196 {strides = array<i32>} : memref<1x8x32xf32, #tpu.memory_space<vmem>>, vector<1x8x32xf32>,
    %c3_i32 = arith.constant 3 : i32
    %198 = arith.cmpi eq, %arg1, %c3_i32 : i32
    %c1_i32 = arith.constant 1 : i32
    %199 = arith.cmpi eq, %arg2, %c1_i32 : i32
    %200 = arith.andi %198, %199 : i1
    %201 = arith.extui %200 : i1 to i32
    %c0_i32_72 = arith.constant 0 : i32
    %202 = arith.cmpi ne, %201, %c0_i32_72 : i32
    scf.if %202 {
      %c0_73 = arith.constant 0 : index
      %c0_74 = arith.constant 0 : index
      %203 = vector.load %arg6[%c0_73, %c0_74] : memref<1x32xf32, #tpu.memory_space<vmem>>, vector<1x32xf32>
      %204 = arith.mulf %196, %196 : vector<1x8x32xf32>
      %cst_75 = arith.constant dense<0.000000e+00> : vector<1x8xf32>
      %205 = vector.multi_reduction <add>, %204, %cst_75 [2] : vector<1x8x32xf32> to vector<1x8xf32>
      %206 = vector.shape_cast %205 : vector<1x8xf32> to vector<1x8x1xf32>
      %cst_76 = arith.constant 3.200000e+01 : f32
      %207 = vector.broadcast %cst_76 : f32 to vector<1x8x1xf32>
      %208 = arith.divf %206, %207 : vector<1x8x1xf32>
      %cst_77 = arith.constant 9.99999997E-7 : f32
      %209 = vector.broadcast %cst_77 : f32 to vector<1x8x1xf32>
      %210 = arith.addf %208, %209 : vector<1x8x1xf32>
      %211 = math.rsqrt %210 : vector<1x8x1xf32>
      %212 = vector.broadcast %211 : vector<1x8x1xf32> to vector<1x8x32xf32>
      %213 = arith.mulf %196, %212 : vector<1x8x32xf32>
      %214 = vector.shape_cast %203 : vector<1x32xf32> to vector<1x1x32xf32>
      %215 = vector.broadcast %214 : vector<1x1x32xf32> to vector<1x8x32xf32>
      %216 = arith.mulf %213, %215 : vector<1x8x32xf32>
      %c0_78 = arith.constant 0 : index
      %c0_79 = arith.constant 0 : index
      %c0_80 = arith.constant 0 : index
      %217 = vector.load %arg14[%c0_78, %c0_79, %c0_80] : memref<1x8x32xf32, #tpu.memory_space<vmem>>, vector<1x8x32xf32>
      tpu.vector_store %arg14[%c0_78, %c0_79, %c0_80], %216 {strides = array<i32>} : memref<1x8x32xf32, #tpu.memory_space<vmem>>, vector<1x8x32xf32>,
    } else {
    }
    return
  }
  func.func @transform_0(%arg0: i32, %arg1: i32, %arg2: i32) -> (i32, i32, i32) {
    %c0_i32 = arith.constant 0 : i32
    %c0_i32_0 = arith.constant 0 : i32
    %c0_i32_1 = arith.constant 0 : i32
    return %arg0, %c0_i32, %c0_i32_0 : i32, i32, i32
  }
  func.func @transform_1(%arg0: i32, %arg1: i32, %arg2: i32) -> (i32, i32, i32) {
    %c0_i32 = arith.constant 0 : i32
    %c0_i32_0 = arith.constant 0 : i32
    %c0_i32_1 = arith.constant 0 : i32
    return %arg0, %c0_i32, %c0_i32_0 : i32, i32, i32
  }
  func.func @transform_2(%arg0: i32, %arg1: i32, %arg2: i32) -> (i32, i32) {
    %c0_i32 = arith.constant 0 : i32
    %c0_i32_0 = arith.constant 0 : i32
    %c0_i32_1 = arith.constant 0 : i32
    return %c0_i32, %c0_i32_0 : i32, i32
  }
  func.func @transform_3(%arg0: i32, %arg1: i32, %arg2: i32) -> (i32, i32) {
    %c0_i32 = arith.constant 0 : i32
    %c0_i32_0 = arith.constant 0 : i32
    %c0_i32_1 = arith.constant 0 : i32
    return %c0_i32, %c0_i32_0 : i32, i32
  }
  func.func @transform_4(%arg0: i32, %arg1: i32, %arg2: i32) -> (i32, i32, i32) {
    %c0_i32 = arith.constant 0 : i32
    %c0_i32_0 = arith.constant 0 : i32
    %c0_i32_1 = arith.constant 0 : i32
    %c0_i32_2 = arith.constant 0 : i32
    return %c0_i32, %c0_i32_0, %c0_i32_1 : i32, i32, i32
  }
  func.func @transform_5(%arg0: i32, %arg1: i32, %arg2: i32) -> (i32, i32, i32) {
    %c0_i32 = arith.constant 0 : i32
    %c0_i32_0 = arith.constant 0 : i32
    %c0_i32_1 = arith.constant 0 : i32
    %c0_i32_2 = arith.constant 0 : i32
    return %c0_i32, %c0_i32_0, %c0_i32_1 : i32, i32, i32
  }
  func.func @transform_6(%arg0: i32, %arg1: i32, %arg2: i32) -> (i32, i32, i32) {
    %c0_i32 = arith.constant 0 : i32
    %c0_i32_0 = arith.constant 0 : i32
    %c0_i32_1 = arith.constant 0 : i32
    %c0_i32_2 = arith.constant 0 : i32
    return %c0_i32, %c0_i32_0, %c0_i32_1 : i32, i32, i32
  }
  func.func @transform_7(%arg0: i32, %arg1: i32, %arg2: i32) -> (i32, i32, i32) {
    %c0_i32 = arith.constant 0 : i32
    %c0_i32_0 = arith.constant 0 : i32
    %c0_i32_1 = arith.constant 0 : i32
    %c0_i32_2 = arith.constant 0 : i32
    return %c0_i32, %c0_i32_0, %c0_i32_1 : i32, i32, i32
  }
  func.func @transform_8(%arg0: i32, %arg1: i32, %arg2: i32) -> (i32, i32, i32) {
    %c0_i32 = arith.constant 0 : i32
    %c0_i32_0 = arith.constant 0 : i32
    %c0_i32_1 = arith.constant 0 : i32
    %c0_i32_2 = arith.constant 0 : i32
    return %c0_i32, %c0_i32_0, %c0_i32_1 : i32, i32, i32
  }
  func.func @transform_9(%arg0: i32, %arg1: i32, %arg2: i32) -> (i32, i32, i32) {
    %c0_i32 = arith.constant 0 : i32
    %c0_i32_0 = arith.constant 0 : i32
    %c0_i32_1 = arith.constant 0 : i32
    %c0_i32_2 = arith.constant 0 : i32
    return %c0_i32, %c0_i32_0, %c0_i32_1 : i32, i32, i32
  }
  func.func @transform_10(%arg0: i32, %arg1: i32, %arg2: i32) -> (i32, i32, i32, i32) {
    %c0_i32 = arith.constant 0 : i32
    %c0_i32_0 = arith.constant 0 : i32
    %c0_i32_1 = arith.constant 0 : i32
    return %arg1, %arg0, %c0_i32, %c0_i32_0 : i32, i32, i32, i32
  }
  func.func @transform_11(%arg0: i32, %arg1: i32, %arg2: i32) -> (i32, i32, i32) {
    %c0_i32 = arith.constant 0 : i32
    %c0_i32_0 = arith.constant 0 : i32
    %c0_i32_1 = arith.constant 0 : i32
    return %arg0, %c0_i32, %c0_i32_0 : i32, i32, i32
  }
}

</mosaic_0001>

<llo_original>
// kernel: tpu_custom_call.1
$region0: #{tpu_custom_call.1}
  #allocation0 [shape = 'u32[]', space=smem, size = 0x4, offset = 0x4, fixed_abs, tag = 'smem constant byte address 0x4 - core index']
  #allocation1 [shape = 'u32[144,128]{1,0:T(1,128)}', space=vmem, size = 0x12000, scoped, tag = 'internal scratch']
  #allocation2 [shape = 'f32[1,8,32]{2,1,0:T(8,128)}', space=vmem, size = 0x1000, scoped, tag = 'scratch operand']
  #allocation3 [shape = 'f32[1,8,32]{2,1,0:T(8,128)}', space=vmem, size = 0x1000, scoped, tag = 'scratch operand']
  %s0 = inlined_call_operand.hbm [shape: f32[2,8,32], index: 0, kind: input, shape index: {}]
  %s1 = inlined_call_operand.hbm [shape: f32[2,8,32], index: 1, kind: input, shape index: {}]
  %s2 = inlined_call_operand.hbm [shape: bf16[32,32], index: 2, kind: input, shape index: {}]
  %s3 = inlined_call_operand.vmem [shape: f32[1,32], index: 3, kind: input, shape index: {}]
  %s4 = inlined_call_operand.hbm [shape: f32[2,4,32], index: 4, kind: input, shape index: {}]
  %s5 = inlined_call_operand.vmem [shape: bf16[2,32,96], index: 5, kind: input, shape index: {}]
  %s6 = inlined_call_operand.vmem [shape: bf16[2,32,32], index: 6, kind: input, shape index: {}]
  %s7 = inlined_call_operand.vmem [shape: bf16[2,32,64], index: 7, kind: input, shape index: {}]
  %s8 = inlined_call_operand.hbm [shape: bf16[2,32,64], index: 8, kind: input, shape index: {}]
  %s9 = inlined_call_operand.vmem [shape: bf16[2,64,32], index: 9, kind: input, shape index: {}]
  %s10 = inlined_call_operand.hbm [shape: f32[4,2,8,32], index: 10, kind: output, shape index: {0}]
  %s11 = inlined_call_operand.hbm [shape: f32[2,8,32], index: 11, kind: output, shape index: {1}]
  %12 = xla_tuple %s10, %s11
  %s13 = sld [smem:[#allocation0]]
  $region113: #{tpu_custom_call.1} parent=0
    _
  %s15 = ssub.s32 1, %s13
  %s16 = scalar_select 0, %s15, %s13
  $region1: #{tpu_custom_call.1} parent=0
    #allocation4 [shape = 'u8[8192]{0}', space=vmem, size = 0x2000, scoped, tag = 'input window, operand 0']
    #allocation5 [shape = 's32[2]{0}', space=sflag, size = 0x8, scoped, tag = 'scoped memory for tpu_custom_call.1']
    #allocation6 [shape = 's32[2]{0}', space=sflag, size = 0x8, scoped, tag = 'scoped memory for tpu_custom_call.1']
    #allocation7 [shape = 'u8[8192]{0}', space=vmem, size = 0x2000, scoped, tag = 'input window, operand 1']
    #allocation8 [shape = 's32[2]{0}', space=sflag, size = 0x8, scoped, tag = 'scoped memory for tpu_custom_call.1']
    #allocation9 [shape = 'u8[8192]{0}', space=vmem, size = 0x2000, scoped, tag = 'input window, operand 2, single buffered']
    #allocation10 [shape = 'u8[4096]{0}', space=vmem, size = 0x1000, scoped, tag = 'input window, operand 4, single buffered']
    #allocation11 [shape = 's32[1]{0}', space=sflag, size = 0x4, scoped, tag = 'scoped memory for tpu_custom_call.1']
    #allocation12 [shape = 'u8[16384]{0}', space=vmem, size = 0x4000, scoped, tag = 'input window, operand 8, single buffered']
    #allocation13 [shape = 'u8[8192]{0}', space=vmem, size = 0x2000, scoped, tag = 'output window, operand 0']
    #allocation14 [shape = 'u8[8192]{0}', space=vmem, size = 0x2000, scoped, tag = 'output window, operand 1']
    #allocation15 [shape = 's32[2]{0}', space=sflag, size = 0x8, scoped, tag = 'scoped memory for tpu_custom_call.1']
    %17 = vsyncpa [#allocation5], 0
    %s18 = scalar_lea.sflag [#allocation5], 1
    %19 = vsyncpa %s18, 0
    %20 = vsyncpa [#allocation8], 0
    %s21 = scalar_lea.sflag [#allocation8], 1
    %22 = vsyncpa %s21, 0
    %23 = vsyncpa [#allocation11], 0
    %24 = vsyncpa [#allocation6], 0
    %s25 = scalar_lea.sflag [#allocation6], 1
    %26 = vsyncpa %s25, 0
    %27 = vsyncpa [#allocation15], 0
    %s28 = scalar_lea.sflag [#allocation15], 1
    %29 = vsyncpa %s28, 0
    loop: start=0, step=1, limit=18
    $region2: #{tpu_custom_call.1} parent=1 // loop_pre_header
      _
    $region3: #{tpu_custom_call.1} parent=1 // loop_header
      %s31 = sphi 0, %s35
      %p32 = scmp.ge.s32.totalorder %s31, 18
      %s38 = sphi 0, %s57
      %s39 = sphi 0, %s53
      %s40 = sphi 0, %s49
      %s41 = sphi 0, %s38
      %s42 = sphi 0, %s39
      %s43 = sphi 0, %s40
      %s44 = sphi 0, %s41
      %s45 = sphi 0, %s42
      %s46 = sphi 0, %s43
      %s60 = sphi 0, %s62
      %s63 = sphi 0, %s60
      %s64 = sphi 0, %s63
      %s80 = sphi 0, %s64
      %s86 = sphi 0, %s88
      %s89 = sphi 0, %s86
      %s90 = sphi 0, %s89
      %s106 = sphi 0, %s90
      %s110 = sphi 0, %s110
      %s112 = sphi 0, %s110
      %s113 = sphi 0, %s112
      %s127 = sphi 0, %s113
      %s131 = sphi 0, %s131
      %s133 = sphi 0, %s131
      %s134 = sphi 0, %s133
      %s148 = sphi 0, %s134
      %s152 = sphi 0, %s152
      %s154 = sphi 0, %s152
      %s155 = sphi 0, %s154
      %s169 = sphi 0, %s155
      %s173 = sphi 0, %s173
      %s175 = sphi 0, %s173
      %s176 = sphi 0, %s175
      %s190 = sphi 0, %s176
      %s194 = sphi 0, %s194
      %s196 = sphi 0, %s194
      %s197 = sphi 0, %s196
      %s211 = sphi 0, %s197
      %s215 = sphi 0, %s215
      %s217 = sphi 0, %s215
      %s218 = sphi 0, %s217
      %s232 = sphi 0, %s218
      %s236 = sphi 0, %s236
      %s238 = sphi 0, %s236
      %s239 = sphi 0, %s238
      %s253 = sphi 0, %s239
      %s257 = sphi 0, %s257
      %s259 = sphi 0, %s257
      %s260 = sphi 0, %s259
      %s274 = sphi 0, %s260
      %s282 = sphi 0, %s284
      %s285 = sphi 0, %s282
      %s286 = sphi 0, %s285
      %s302 = sphi 0, %s286
      %s308 = sphi 0, %s310
      %s311 = sphi 0, %s308
      %s312 = sphi 0, %s311
      %s328 = sphi 0, %s312
    $region4: #{tpu_custom_call.1} parent=1 // loop_header_branch
      %34 = sbr.rel (%p32) target = $region8
    $region5: #{tpu_custom_call.1} parent=1 // loop_body
      %s36 = ssub.s32 %s31, 1
      %s37 = ssub.s32 %s31, 2
      %s47 = sadd.s32 1, %s40
      %p48 = scmp.ge.s32.totalorder %s47, 2
      %s49 = scalar_select %p48, 0, %s47
      %s50 = sadd.s32 1, %s39
      %s51 = scalar_select %p48, %s50, %s39
      %p52 = scmp.ge.s32.totalorder %s51, 4
      %s53 = scalar_select %p52, 0, %s51
      %s54 = sadd.s32 1, %s38
      %s55 = scalar_select %p52, %s54, %s38
      %p56 = scmp.ge.s32.totalorder %s55, 2
      %s57 = scalar_select %p56, 0, %s55
      %s58 = ssub.s32 %s38, %s57
      %p59 = scmp.eq.s32.totalorder %s58, 0
      %s61 = sadd.s32 %s60, 1
      %s62 = scalar_select %p59, %s60, %s61
      %p65 = pneg %p59
      %p66 = scmp.eq.s32.totalorder %s31, 15
      %p67 = por %p65, %p66
      %p68 = scmp.ne.s32.totalorder %s60, %s63
      %p69 = scmp.eq.s32.totalorder %s31, 0
      %p70 = por %p68, %p69
      %p71 = scmp.ne.s32.totalorder %s60, %s63
      %p72 = scmp.eq.s32.totalorder %s36, 15
      %p73 = por %p71, %p72
      %p74 = scmp.ne.s32.totalorder %s63, %s64
      %p75 = scmp.eq.s32.totalorder %s36, 0
      %p76 = por %p74, %p75
      %p77 = scmp.ne.s32.totalorder %s63, %s64
      %p78 = scmp.eq.s32.totalorder %s37, 15
      %p79 = por %p77, %p78
      %p81 = scmp.ne.s32.totalorder %s64, %s80
      %p82 = scmp.eq.s32.totalorder %s37, 0
      %p83 = por %p81, %p82
      %s84 = ssub.s32 %s38, %s57
      %p85 = scmp.eq.s32.totalorder %s84, 0
      %s87 = sadd.s32 %s86, 1
      %s88 = scalar_select %p85, %s86, %s87
      %p91 = pneg %p85
      %p92 = scmp.eq.s32.totalorder %s31, 15
      %p93 = por %p91, %p92
      %p94 = scmp.ne.s32.totalorder %s86, %s89
      %p95 = scmp.eq.s32.totalorder %s31, 0
      %p96 = por %p94, %p95
      %p97 = scmp.ne.s32.totalorder %s86, %s89
      %p98 = scmp.eq.s32.totalorder %s36, 15
      %p99 = por %p97, %p98
      %p100 = scmp.ne.s32.totalorder %s89, %s90
      %p101 = scmp.eq.s32.totalorder %s36, 0
      %p102 = por %p100, %p101
      %p103 = scmp.ne.s32.totalorder %s89, %s90
      %p104 = scmp.eq.s32.totalorder %s37, 15
      %p105 = por %p103, %p104
      %p107 = scmp.ne.s32.totalorder %s90, %s106
      %p108 = scmp.eq.s32.totalorder %s37, 0
      %p109 = por %p107, %p108
      %s111 = sadd.s32 %s110, 1
      %p114 = scmp.eq.s32.totalorder %s31, 15
      %p115 = scmp.ne.s32.totalorder %s110, %s112
      %p116 = scmp.eq.s32.totalorder %s31, 0
      %p117 = por %p115, %p116
      %p118 = scmp.ne.s32.totalorder %s110, %s112
      %p119 = scmp.eq.s32.totalorder %s36, 15
      %p120 = por %p118, %p119
      %p121 = scmp.ne.s32.totalorder %s112, %s113
      %p122 = scmp.eq.s32.totalorder %s36, 0
      %p123 = por %p121, %p122
      %p124 = scmp.ne.s32.totalorder %s112, %s113
      %p125 = scmp.eq.s32.totalorder %s37, 15
      %p126 = por %p124, %p125
      %p128 = scmp.ne.s32.totalorder %s113, %s127
      %p129 = scmp.eq.s32.totalorder %s37, 0
      %p130 = por %p128, %p129
      %s132 = sadd.s32 %s131, 1
      %p135 = scmp.eq.s32.totalorder %s31, 15
      %p136 = scmp.ne.s32.totalorder %s131, %s133
      %p137 = scmp.eq.s32.totalorder %s31, 0
      %p138 = por %p136, %p137
      %p139 = scmp.ne.s32.totalorder %s131, %s133
      %p140 = scmp.eq.s32.totalorder %s36, 15
      %p141 = por %p139, %p140
      %p142 = scmp.ne.s32.totalorder %s133, %s134
      %p143 = scmp.eq.s32.totalorder %s36, 0
      %p144 = por %p142, %p143
      %p145 = scmp.ne.s32.totalorder %s133, %s134
      %p146 = scmp.eq.s32.totalorder %s37, 15
      %p147 = por %p145, %p146
      %p149 = scmp.ne.s32.totalorder %s134, %s148
      %p150 = scmp.eq.s32.totalorder %s37, 0
      %p151 = por %p149, %p150
      %s153 = sadd.s32 %s152, 1
      %p156 = scmp.eq.s32.totalorder %s31, 15
      %p157 = scmp.ne.s32.totalorder %s152, %s154
      %p158 = scmp.eq.s32.totalorder %s31, 0
      %p159 = por %p157, %p158
      %p160 = scmp.ne.s32.totalorder %s152, %s154
      %p161 = scmp.eq.s32.totalorder %s36, 15
      %p162 = por %p160, %p161
      %p163 = scmp.ne.s32.totalorder %s154, %s155
      %p164 = scmp.eq.s32.totalorder %s36, 0
      %p165 = por %p163, %p164
      %p166 = scmp.ne.s32.totalorder %s154, %s155
      %p167 = scmp.eq.s32.totalorder %s37, 15
      %p168 = por %p166, %p167
      %p170 = scmp.ne.s32.totalorder %s155, %s169
      %p171 = scmp.eq.s32.totalorder %s37, 0
      %p172 = por %p170, %p171
      %s174 = sadd.s32 %s173, 1
      %p177 = scmp.eq.s32.totalorder %s31, 15
      %p178 = scmp.ne.s32.totalorder %s173, %s175
      %p179 = scmp.eq.s32.totalorder %s31, 0
      %p180 = por %p178, %p179
      %p181 = scmp.ne.s32.totalorder %s173, %s175
      %p182 = scmp.eq.s32.totalorder %s36, 15
      %p183 = por %p181, %p182
      %p184 = scmp.ne.s32.totalorder %s175, %s176
      %p185 = scmp.eq.s32.totalorder %s36, 0
      %p186 = por %p184, %p185
      %p187 = scmp.ne.s32.totalorder %s175, %s176
      %p188 = scmp.eq.s32.totalorder %s37, 15
      %p189 = por %p187, %p188
      %p191 = scmp.ne.s32.totalorder %s176, %s190
      %p192 = scmp.eq.s32.totalorder %s37, 0
      %p193 = por %p191, %p192
      %s195 = sadd.s32 %s194, 1
      %p198 = scmp.eq.s32.totalorder %s31, 15
      %p199 = scmp.ne.s32.totalorder %s194, %s196
      %p200 = scmp.eq.s32.totalorder %s31, 0
      %p201 = por %p199, %p200
      %p202 = scmp.ne.s32.totalorder %s194, %s196
      %p203 = scmp.eq.s32.totalorder %s36, 15
      %p204 = por %p202, %p203
      %p205 = scmp.ne.s32.totalorder %s196, %s197
      %p206 = scmp.eq.s32.totalorder %s36, 0
      %p207 = por %p205, %p206
      %p208 = scmp.ne.s32.totalorder %s196, %s197
      %p209 = scmp.eq.s32.totalorder %s37, 15
      %p210 = por %p208, %p209
      %p212 = scmp.ne.s32.totalorder %s197, %s211
      %p213 = scmp.eq.s32.totalorder %s37, 0
      %p214 = por %p212, %p213
      %s216 = sadd.s32 %s215, 1
      %p219 = scmp.eq.s32.totalorder %s31, 15
      %p220 = scmp.ne.s32.totalorder %s215, %s217
      %p221 = scmp.eq.s32.totalorder %s31, 0
      %p222 = por %p220, %p221
      %p223 = scmp.ne.s32.totalorder %s215, %s217
      %p224 = scmp.eq.s32.totalorder %s36, 15
      %p225 = por %p223, %p224
      %p226 = scmp.ne.s32.totalorder %s217, %s218
      %p227 = scmp.eq.s32.totalorder %s36, 0
      %p228 = por %p226, %p227
      %p229 = scmp.ne.s32.totalorder %s217, %s218
      %p230 = scmp.eq.s32.totalorder %s37, 15
      %p231 = por %p229, %p230
      %p233 = scmp.ne.s32.totalorder %s218, %s232
      %p234 = scmp.eq.s32.totalorder %s37, 0
      %p235 = por %p233, %p234
      %s237 = sadd.s32 %s236, 1
      %p240 = scmp.eq.s32.totalorder %s31, 15
      %p241 = scmp.ne.s32.totalorder %s236, %s238
      %p242 = scmp.eq.s32.totalorder %s31, 0
      %p243 = por %p241, %p242
      %p244 = scmp.ne.s32.totalorder %s236, %s238
      %p245 = scmp.eq.s32.totalorder %s36, 15
      %p246 = por %p244, %p245
      %p247 = scmp.ne.s32.totalorder %s238, %s239
      %p248 = scmp.eq.s32.totalorder %s36, 0
      %p249 = por %p247, %p248
      %p250 = scmp.ne.s32.totalorder %s238, %s239
      %p251 = scmp.eq.s32.totalorder %s37, 15
      %p252 = por %p250, %p251
      %p254 = scmp.ne.s32.totalorder %s239, %s253
      %p255 = scmp.eq.s32.totalorder %s37, 0
      %p256 = por %p254, %p255
      %s258 = sadd.s32 %s257, 1
      %p261 = scmp.eq.s32.totalorder %s31, 15
      %p262 = scmp.ne.s32.totalorder %s257, %s259
      %p263 = scmp.eq.s32.totalorder %s31, 0
      %p264 = por %p262, %p263
      %p265 = scmp.ne.s32.totalorder %s257, %s259
      %p266 = scmp.eq.s32.totalorder %s36, 15
      %p267 = por %p265, %p266
      %p268 = scmp.ne.s32.totalorder %s259, %s260
      %p269 = scmp.eq.s32.totalorder %s36, 0
      %p270 = por %p268, %p269
      %p271 = scmp.ne.s32.totalorder %s259, %s260
      %p272 = scmp.eq.s32.totalorder %s37, 15
      %p273 = por %p271, %p272
      %p275 = scmp.ne.s32.totalorder %s260, %s274
      %p276 = scmp.eq.s32.totalorder %s37, 0
      %p277 = por %p275, %p276
      %s278 = ssub.s32 %s39, %s53
      %s279 = ssub.s32 %s38, %s57
      %s280 = sor.u32 %s278, %s279
      %p281 = scmp.eq.s32.totalorder %s280, 0
      %s283 = sadd.s32 %s282, 1
      %s284 = scalar_select %p281, %s282, %s283
      %p287 = pneg %p281
      %p288 = scmp.eq.s32.totalorder %s31, 15
      %p289 = por %p287, %p288
      %p290 = scmp.ne.s32.totalorder %s282, %s285
      %p291 = scmp.eq.s32.totalorder %s31, 0
      %p292 = por %p290, %p291
      %p293 = scmp.ne.s32.totalorder %s282, %s285
      %p294 = scmp.eq.s32.totalorder %s36, 15
      %p295 = por %p293, %p294
      %p296 = scmp.ne.s32.totalorder %s285, %s286
      %p297 = scmp.eq.s32.totalorder %s36, 0
      %p298 = por %p296, %p297
      %p299 = scmp.ne.s32.totalorder %s285, %s286
      %p300 = scmp.eq.s32.totalorder %s37, 15
      %p301 = por %p299, %p300
      %p303 = scmp.ne.s32.totalorder %s286, %s302
      %p304 = scmp.eq.s32.totalorder %s37, 0
      %p305 = por %p303, %p304
      %s306 = ssub.s32 %s38, %s57
      %p307 = scmp.eq.s32.totalorder %s306, 0
      %s309 = sadd.s32 %s308, 1
      %s310 = scalar_select %p307, %s308, %s309
      %p313 = pneg %p307
      %p314 = scmp.eq.s32.totalorder %s31, 15
      %p315 = por %p313, %p314
      %p316 = scmp.ne.s32.totalorder %s308, %s311
      %p317 = scmp.eq.s32.totalorder %s31, 0
      %p318 = por %p316, %p317
      %p319 = scmp.ne.s32.totalorder %s308, %s311
      %p320 = scmp.eq.s32.totalorder %s36, 15
      %p321 = por %p319, %p320
      %p322 = scmp.ne.s32.totalorder %s311, %s312
      %p323 = scmp.eq.s32.totalorder %s36, 0
      %p324 = por %p322, %p323
      %p325 = scmp.ne.s32.totalorder %s311, %s312
      %p326 = scmp.eq.s32.totalorder %s37, 15
      %p327 = por %p325, %p326
      %p329 = scmp.ne.s32.totalorder %s312, %s328
      %p330 = scmp.eq.s32.totalorder %s37, 0
      %p331 = por %p329, %p330
      %p332 = scmp.le.s32.totalorder 1, %s31
      %p333 = scmp.lt.s32.totalorder %s31, 17
      %p334 = pnand %p332, %p333
      %p335 = pneg %p334
      // Predicated region
      $region9: #{tpu_custom_call.1} parent=5 // pred_check
        _
      $region10: #{tpu_custom_call.1} parent=5 // pred_check_branch
        %337 = sbr.rel (%p334) target = $region12
      $region11: #{tpu_custom_call.1} parent=5 // pred_region
        %s338 = ssub.s32 %s31, 1
        // Predicated region
        $region13: #{tpu_custom_call.1} parent=11 // pred_check
          %p339 = pneg %p123
        $region14: #{tpu_custom_call.1} parent=11 // pred_check_branch
          %341 = sbr.rel (%p339) target = $region16
        $region15: #{tpu_custom_call.1} parent=11 // pred_region
          %s343 = ssub.s32 256, 256
          %344 = vsyncadd [#allocation8], %s343
          %s345 = sshll.u32 [#allocation9], 4
          %s346 = int_to_ptr.vmem [resolvable:$true] %s345
          %351 = dma.hbm_to_vmem [thread:$0]  %s2, 256, %s346, [#allocation8], 64, 64, 4
        $region16: #{tpu_custom_call.1} parent=11 // pred_fallthru
          _
        // Predicated region
        $region17: #{tpu_custom_call.1} parent=11 // pred_check
          %p352 = pneg %p144
        $region18: #{tpu_custom_call.1} parent=11 // pred_check_branch
          %354 = sbr.rel (%p352) target = $region20
        $region19: #{tpu_custom_call.1} parent=11 // pred_region
          _
        $region20: #{tpu_custom_call.1} parent=11 // pred_fallthru
          _
        // Predicated region
        $region21: #{tpu_custom_call.1} parent=11 // pred_check
          %p355 = pneg %p165
        $region22: #{tpu_custom_call.1} parent=11 // pred_check_branch
          %357 = sbr.rel (%p355) target = $region24
        $region23: #{tpu_custom_call.1} parent=11 // pred_region
          %s359 = ssub.s32 128, 128
          %360 = vsyncadd [#allocation11], %s359
          %s361 = sshll.u32 [#allocation10], 4
          %s362 = int_to_ptr.vmem [resolvable:$true] %s361
          %367 = dma.hbm_to_vmem [thread:$0]  %s4, 128, %s362, [#allocation11], 64, 64, 4
        $region24: #{tpu_custom_call.1} parent=11 // pred_fallthru
          _
        // Predicated region
        $region25: #{tpu_custom_call.1} parent=11 // pred_check
          %p368 = pneg %p186
        $region26: #{tpu_custom_call.1} parent=11 // pred_check_branch
          %370 = sbr.rel (%p368) target = $region28
        $region27: #{tpu_custom_call.1} parent=11 // pred_region
          _
        $region28: #{tpu_custom_call.1} parent=11 // pred_fallthru
          _
        // Predicated region
        $region29: #{tpu_custom_call.1} parent=11 // pred_check
          %p371 = pneg %p207
        $region30: #{tpu_custom_call.1} parent=11 // pred_check_branch
          %373 = sbr.rel (%p371) target = $region32
        $region31: #{tpu_custom_call.1} parent=11 // pred_region
          _
        $region32: #{tpu_custom_call.1} parent=11 // pred_fallthru
          _
        // Predicated region
        $region33: #{tpu_custom_call.1} parent=11 // pred_check
          %p374 = pneg %p228
        $region34: #{tpu_custom_call.1} parent=11 // pred_check_branch
          %376 = sbr.rel (%p374) target = $region36
        $region35: #{tpu_custom_call.1} parent=11 // pred_region
          _
        $region36: #{tpu_custom_call.1} parent=11 // pred_fallthru
          _
        // Predicated region
        $region37: #{tpu_custom_call.1} parent=11 // pred_check
          %p377 = pneg %p249
        $region38: #{tpu_custom_call.1} parent=11 // pred_check_branch
          %379 = sbr.rel (%p377) target = $region40
        $region39: #{tpu_custom_call.1} parent=11 // pred_region
          %s381 = ssub.s32 512, 512
          %382 = vsyncadd [#allocation11], %s381
          %s383 = sshll.u32 [#allocation12], 4
          %s384 = int_to_ptr.vmem [resolvable:$true] %s383
          %389 = dma.hbm_to_vmem [thread:$0]  %s8, 512, %s384, [#allocation11], 64, 64, 4
        $region40: #{tpu_custom_call.1} parent=11 // pred_fallthru
          _
        // Predicated region
        $region41: #{tpu_custom_call.1} parent=11 // pred_check
          %p390 = pneg %p270
        $region42: #{tpu_custom_call.1} parent=11 // pred_check_branch
          %392 = sbr.rel (%p390) target = $region44
        $region43: #{tpu_custom_call.1} parent=11 // pred_region
          _
        $region44: #{tpu_custom_call.1} parent=11 // pred_fallthru
          _
      $region12: #{tpu_custom_call.1} parent=5 // pred_fallthru
        _
      %p393 = scmp.lt.s32.totalorder %s31, 16
      // Predicated region
      $region45: #{tpu_custom_call.1} parent=5 // pred_check
        %p394 = pneg %p393
      $region46: #{tpu_custom_call.1} parent=5 // pred_check_branch
        %396 = sbr.rel (%p394) target = $region48
      $region47: #{tpu_custom_call.1} parent=5 // pred_region
        // Predicated region
        $region49: #{tpu_custom_call.1} parent=47 // pred_check
          %p397 = pneg %p70
        $region50: #{tpu_custom_call.1} parent=47 // pred_check_branch
          %399 = sbr.rel (%p397) target = $region52
        $region51: #{tpu_custom_call.1} parent=47 // pred_region
          %s400 = sand.u32 %s60, 1
          %s401 = scalar_lea.sflag [#allocation5], %s400
          %s402 = sand.u32 %s60, 1
          %s403 = smul.addr %s402, 8
          %s404 = scalar_lea.vmem [#allocation4], %s403
          %s406 = ssub.s32 128, 128
          %407 = vsyncadd %s401, %s406
          %s408 = smul.addr %s38, 128
          %s409 = scalar_lea.hbm %s0, %s408
          %s411 = sshll.u32 %s404, 4
          %s412 = int_to_ptr.vmem [resolvable:$true] %s411
          %414 = dma.hbm_to_vmem [thread:$0]  %s409, 128, %s412, %s401
        $region52: #{tpu_custom_call.1} parent=47 // pred_fallthru
          _
        // Predicated region
        $region53: #{tpu_custom_call.1} parent=47 // pred_check
          %p415 = pneg %p96
        $region54: #{tpu_custom_call.1} parent=47 // pred_check_branch
          %417 = sbr.rel (%p415) target = $region56
        $region55: #{tpu_custom_call.1} parent=47 // pred_region
          %s418 = sand.u32 %s31, 1
          %s419 = scalar_lea.sflag [#allocation8], %s418
          %s420 = sand.u32 %s86, 1
          %s421 = smul.addr %s420, 8
          %s422 = scalar_lea.vmem [#allocation7], %s421
          %s424 = ssub.s32 128, 128
          %425 = vsyncadd %s419, %s424
          %s426 = smul.addr %s38, 128
          %s427 = scalar_lea.hbm %s1, %s426
          %s429 = sshll.u32 %s422, 4
          %s430 = int_to_ptr.vmem [resolvable:$true] %s429
          %432 = dma.hbm_to_vmem [thread:$0]  %s427, 128, %s430, %s419
        $region56: #{tpu_custom_call.1} parent=47 // pred_fallthru
          _
      $region48: #{tpu_custom_call.1} parent=5 // pred_fallthru
        _
      %p433 = scmp.le.s32.totalorder 1, %s31
      %p434 = scmp.lt.s32.totalorder %s31, 17
      %p435 = pnand %p433, %p434
      %p436 = pneg %p435
      // Predicated region
      $region57: #{tpu_custom_call.1} parent=5 // pred_check
        _
      $region58: #{tpu_custom_call.1} parent=5 // pred_check_branch
        %438 = sbr.rel (%p435) target = $region60
      $region59: #{tpu_custom_call.1} parent=5 // pred_region
        %s439 = ssub.s32 %s31, 1
        %s440 = sand.u32 %s63, 1
        %s441 = scalar_lea.sflag [#allocation5], %s440
        %s442 = sand.u32 %s63, 1
        %s443 = smul.addr %s442, 8
        %s444 = scalar_lea.vmem [#allocation4], %s443
        // Predicated region
        $region61: #{tpu_custom_call.1} parent=59 // pred_check
          %p445 = pneg %p76
        $region62: #{tpu_custom_call.1} parent=59 // pred_check_branch
          %447 = sbr.rel (%p445) target = $region64
        $region63: #{tpu_custom_call.1} parent=59 // pred_region
          %448 = dma.done %s441, 128
        $region64: #{tpu_custom_call.1} parent=59 // pred_fallthru
          _
        %s449 = sand.u32 %s36, 1
        %s450 = scalar_lea.sflag [#allocation8], %s449
        %s451 = sand.u32 %s89, 1
        %s452 = smul.addr %s451, 8
        %s453 = scalar_lea.vmem [#allocation7], %s452
        // Predicated region
        $region65: #{tpu_custom_call.1} parent=59 // pred_check
          %p454 = pneg %p102
        $region66: #{tpu_custom_call.1} parent=59 // pred_check_branch
          %456 = sbr.rel (%p454) target = $region68
        $region67: #{tpu_custom_call.1} parent=59 // pred_region
          %457 = dma.done %s450, 128
        $region68: #{tpu_custom_call.1} parent=59 // pred_fallthru
          _
        // Predicated region
        $region69: #{tpu_custom_call.1} parent=59 // pred_check
          %p458 = pneg %p123
        $region70: #{tpu_custom_call.1} parent=59 // pred_check_branch
          %460 = sbr.rel (%p458) target = $region72
        $region71: #{tpu_custom_call.1} parent=59 // pred_region
          %461 = dma.done [#allocation8], 256
        $region72: #{tpu_custom_call.1} parent=59 // pred_fallthru
          _
        // Predicated region
        $region73: #{tpu_custom_call.1} parent=59 // pred_check
          %p462 = pneg %p165
        $region74: #{tpu_custom_call.1} parent=59 // pred_check_branch
          %464 = sbr.rel (%p462) target = $region76
        $region75: #{tpu_custom_call.1} parent=59 // pred_region
          %465 = dma.done [#allocation11], 128
        $region76: #{tpu_custom_call.1} parent=59 // pred_fallthru
          _
        // Predicated region
        $region77: #{tpu_custom_call.1} parent=59 // pred_check
          %p466 = pneg %p249
        $region78: #{tpu_custom_call.1} parent=59 // pred_check_branch
          %468 = sbr.rel (%p466) target = $region80
        $region79: #{tpu_custom_call.1} parent=59 // pred_region
          %469 = dma.done [#allocation11], 512
        $region80: #{tpu_custom_call.1} parent=59 // pred_fallthru
          _
        %s470 = sand.u32 %s63, 1
        %s471 = scalar_lea.sflag [#allocation5], %s470
        %s472 = sand.u32 %s63, 1
        %s473 = smul.addr %s472, 8
        %s474 = scalar_lea.vmem [#allocation4], %s473
        %p475 = pneg %p76
        %p476 = pneg %p73
        %s477 = sand.u32 %s36, 1
        %s478 = scalar_lea.sflag [#allocation8], %s477
        %s479 = sand.u32 %s89, 1
        %s480 = smul.addr %s479, 8
        %s481 = scalar_lea.vmem [#allocation7], %s480
        %p482 = pneg %p102
        %p483 = pneg %p99
        %p484 = pneg %p123
        %p485 = pneg %p120
        %p486 = pneg %p144
        %p487 = pneg %p141
        %p488 = pneg %p165
        %p489 = pneg %p162
        %p490 = pneg %p186
        %p491 = pneg %p183
        %p492 = pneg %p207
        %p493 = pneg %p204
        %p494 = pneg %p228
        %p495 = pneg %p225
        %p496 = pneg %p249
        %p497 = pneg %p246
        %p498 = pneg %p270
        %p499 = pneg %p267
        %p500 = pneg %p298
        %p501 = pneg %p295
        %s502 = sand.u32 %s285, 1
        %s503 = scalar_lea.sflag [#allocation6], %s502
        %s504 = sand.u32 %s285, 1
        %s505 = smul.addr %s504, 8
        %s506 = scalar_lea.vmem [#allocation13], %s505
        %p507 = pneg %p324
        %p508 = pneg %p321
        %s509 = sand.u32 %s311, 1
        %s510 = scalar_lea.sflag [#allocation15], %s509
        %s511 = sand.u32 %s311, 1
        %s512 = smul.addr %s511, 8
        %s513 = scalar_lea.vmem [#allocation14], %s512
        %p515 = scmp.eq.s32.totalorder %s42, 0
        %p516 = scmp.eq.s32.totalorder %s43, 0
        %p517 = pnand %p515, %p516
        %p518 = pneg %p517
        // Predicated region
        $region81: #{tpu_custom_call.1} parent=59 // pred_check
          _
        $region82: #{tpu_custom_call.1} parent=59 // pred_check_branch
          %520 = sbr.rel (%p517) target = $region84
        $region83: #{tpu_custom_call.1} parent=59 // pred_region
          %v521 = vld [vmem:[%s444] sm:$0xff]
          %vm522 = vcmask 261120
          %523 = vst.msk [vmem:[#allocation2] sm:$0xff] %vm522, %v521
        $region84: #{tpu_custom_call.1} parent=59 // pred_fallthru
          _
        // Predicated region
        $region85: #{tpu_custom_call.1} parent=59 // pred_check
          %p524 = pneg %p516
        $region86: #{tpu_custom_call.1} parent=59 // pred_check_branch
          %526 = sbr.rel (%p524) target = $region88
        $region87: #{tpu_custom_call.1} parent=59 // pred_region
          %v527 = vld [vmem:[#allocation2] sm:$0xff]
          %vm528 = vcmask 261120
          %529 = vst.msk [vmem:[%s506] sm:$0xff] %vm528, %v527
          %v530 = vld [vmem:[#allocation9] sm:$0xf]
          %v531 = vld [vmem:[#allocation9 + $0x4] sm:$0xf]
          %v532 = vld [vmem:[#allocation9 + $0x8] sm:$0xf]
          %v533 = vld [vmem:[#allocation9 + $0xc] sm:$0xf]
          %v534 = vpack.c.bf16 %v527, %v527
          %v539 = vunpack.c.l.b16 %v530
          %v540 = vunpack.c.l.b16 %v531
          %v541 = vunpack.c.l.b16 %v532
          %v542 = vunpack.c.l.b16 %v533
          %v543 = vpack.c.b16 %v540, %v539
          %v544 = vpack.c.b16 %v542, %v541
          %v548 = vsel %vm528, %v534, 0
          %550 = vmatprep.subr.bf16.mxu0 0
          %551 = vmatpush1.bf16.msra.mxu0 0
          %552 = vmatprep.subr.bf16.mxu0 0
          %553 = vmatpush1.bf16.msra.mxu0 0
          %554 = vmatprep.subr.bf16.mxu0 0
          %555 = vmatpush1.bf16.msra.mxu0 0
          %556 = vmatprep.subr.bf16.mxu0 0
          %557 = vmatpush1.bf16.msra.mxu0 0
          %558 = vmatprep.subr.bf16.mxu0 0
          %559 = vmatpush1.bf16.msra.mxu0 0
          %560 = vmatprep.subr.bf16.mxu0 0
          %561 = vmatpush1.bf16.msra.mxu0 0
          %562 = vmatprep.subr.bf16.mxu0 0
          %563 = vmatpush1.bf16.msra.mxu0 %v544
          %564 = vmatprep.subr.bf16.mxu0 0
          %565 = vmatpush1.bf16.msra.mxu0 %v543
          %566 = vmatprep.subr.bf16.mxu0 0
          %567 = vmatpush2.bf16.msra.mxu0 0
          %568 = vmatprep.subr.bf16.mxu0 0
          %569 = vmatpush2.bf16.msra.mxu0 0
          %570 = vmatprep.subr.bf16.mxu0 0
          %571 = vmatpush2.bf16.msra.mxu0 0
          %572 = vmatprep.subr.bf16.mxu0 0
          %573 = vmatpush2.bf16.msra.mxu0 0
          %574 = vmatprep.subr.bf16.mxu0 0
          %575 = vmatpush2.bf16.msra.mxu0 0
          %576 = vmatprep.subr.bf16.mxu0 0
          %577 = vmatpush2.bf16.msra.mxu0 0
          %578 = vmatprep.subr.bf16.mxu0 0
          %579 = vmatpush2.bf16.msra.mxu0 0
          %580 = vmatprep.subr.bf16.mxu0 0
          %581 = vmatpush2.bf16.msra.mxu0 0
          %582 = vmatprep.mubr.bf16.mxu0 0
          %583 = vmatmul.mubr.bf16.gmra.mxu0 %v548
          %v584 = vpop.f32.mrf.mxu0
          %v585 = vadd.f32 0.0, %v584
          %v586 = vpop.f32.mrf.mxu0
          %v587 = vpop.f32.mrf.mxu0
          %v588 = vpop.f32.mrf.mxu0
          %589 = vdwg.mxu0
          %v590 = vld [vmem:[%s453] sm:$0xff]
          %v591 = vadd.f32 %v585, %v590
          %592 = vst.msk [vmem:[#allocation2] sm:$0xff] %vm528, %v591
        $region88: #{tpu_custom_call.1} parent=59 // pred_fallthru
          _
        %v593 = vld [vmem:[#allocation2] sm:$0xff]
        %s594 = smul.u32 %s43, 4
        %s595 = scalar_lea.vmem [#allocation10], %s594
        %v596 = vld [vmem:[%s595] sm:$0xf]
        %v597 = vmul.f32 %v593, %v593
        %vm598 = vcmask 261120
        %v599 = vsel %vm598, %v597, 0.0
        %600 = vadd.xlane.f32.xlu0 %v599
        %v601 = vpop.xlane.xlu0 %600
        %v602 = vrcp.pop 32.0
        %v603 = vmul.f32 %v601, %v602
        %v604 = vadd.f32 %v603, 1e-06
        %v605 = vrsqrt.pop %v604
        %v606 = vmul.f32 %v593, %v605
        %v607 = vlaneseq
        %v608 = vshrl.u32 %v607, 7
        %v609 = vsub.s32 0, %v608
        %v610 = vrot.slane %v596, %v609
        %v611 = vmul.f32 %v606, %v610
        %s612 = smul.addr %s594, 4
        %s613 = scalar_lea.vmem %s5, %s612
        %v614 = vld [vmem:[%s613] sm:$0xf]
        %v615 = vld [vmem:[%s613 + $0x4] sm:$0xf]
        %v616 = vld [vmem:[%s613 + $0x8] sm:$0xf]
        %v617 = vld [vmem:[%s613 + $0xc] sm:$0xf]
        %v618 = vpack.c.bf16 %v611, %v611
        %v623 = vunpack.c.l.b16 %v614
        %v624 = vunpack.c.l.b16 %v615
        %v625 = vunpack.c.l.b16 %v616
        %v626 = vunpack.c.l.b16 %v617
        %v627 = vpack.c.b16 %v624, %v623
        %v628 = vpack.c.b16 %v626, %v625
        %v632 = vsel %vm598, %v618, 0
        %634 = vmatprep.subr.bf16.mxu0 0
        %635 = vmatpush1.bf16.msra.mxu0 0
        %636 = vmatprep.subr.bf16.mxu0 0
        %637 = vmatpush1.bf16.msra.mxu0 0
        %638 = vmatprep.subr.bf16.mxu0 0
        %639 = vmatpush1.bf16.msra.mxu0 0
        %640 = vmatprep.subr.bf16.mxu0 0
        %641 = vmatpush1.bf16.msra.mxu0 0
        %642 = vmatprep.subr.bf16.mxu0 0
        %643 = vmatpush1.bf16.msra.mxu0 0
        %644 = vmatprep.subr.bf16.mxu0 0
        %645 = vmatpush1.bf16.msra.mxu0 0
        %646 = vmatprep.subr.bf16.mxu0 0
        %647 = vmatpush1.bf16.msra.mxu0 %v628
        %648 = vmatprep.subr.bf16.mxu0 0
        %649 = vmatpush1.bf16.msra.mxu0 %v627
        %650 = vmatprep.subr.bf16.mxu0 0
        %651 = vmatpush2.bf16.msra.mxu0 0
        %652 = vmatprep.subr.bf16.mxu0 0
        %653 = vmatpush2.bf16.msra.mxu0 0
        %654 = vmatprep.subr.bf16.mxu0 0
        %655 = vmatpush2.bf16.msra.mxu0 0
        %656 = vmatprep.subr.bf16.mxu0 0
        %657 = vmatpush2.bf16.msra.mxu0 0
        %658 = vmatprep.subr.bf16.mxu0 0
        %659 = vmatpush2.bf16.msra.mxu0 0
        %660 = vmatprep.subr.bf16.mxu0 0
        %661 = vmatpush2.bf16.msra.mxu0 0
        %662 = vmatprep.subr.bf16.mxu0 0
        %663 = vmatpush2.bf16.msra.mxu0 0
        %664 = vmatprep.subr.bf16.mxu0 0
        %665 = vmatpush2.bf16.msra.mxu0 0
        %666 = vmatprep.mubr.bf16.mxu0 0
        %667 = vmatmul.mubr.bf16.gmra.mxu0 %v632
        %v668 = vpop.f32.mrf.mxu0
        %v669 = vadd.f32 0.0, %v668
        %v670 = vpop.f32.mrf.mxu0
        %v671 = vpop.f32.mrf.mxu0
        %v672 = vpop.f32.mrf.mxu0
        %673 = vdwg.mxu0
        %v674 = vpack.c.bf16 %v669, %v669
        %v675 = vlaneseq
        %v676 = vshrl.u32 %v675, 7
        %v677 = vlaneseq
        %v678 = vand.u32 %v677, 127
        %vm679 = vcmp.gt.s32.totalorder %v678, %v676
        %v680 = vsel %vm679, -1e+30, 0.0
        %682 = vrot.lane.b32.xlu0 %v674, 96
        %v683 = vpop.permute.xlu0 %682
        %vm684 = vcmask 64512
        %v686 = vsel %vm684, %v674, 0
        %v689 = vsel %vm684, %v683, 0
        %691 = vmatprep.subr.bf16.mxu0 0
        %692 = vmatpush1.bf16.xpose.msra.mxu0 0
        %693 = vmatprep.subr.bf16.mxu0 0
        %694 = vmatpush1.bf16.xpose.msra.mxu0 0
        %695 = vmatprep.subr.bf16.mxu0 0
        %696 = vmatpush1.bf16.xpose.msra.mxu0 0
        %697 = vmatprep.subr.bf16.mxu0 0
        %698 = vmatpush1.bf16.xpose.msra.mxu0 0
        %699 = vmatprep.subr.bf16.mxu0 0
        %700 = vmatpush1.bf16.xpose.msra.mxu0 0
        %701 = vmatprep.subr.bf16.mxu0 0
        %702 = vmatpush1.bf16.xpose.msra.mxu0 0
        %703 = vmatprep.subr.bf16.mxu0 0
        %704 = vmatpush1.bf16.xpose.msra.mxu0 0
        %705 = vmatprep.subr.bf16.mxu0 0
        %706 = vmatpush1.bf16.xpose.msra.mxu0 %v689
        %707 = vmatprep.subr.bf16.mxu0 0
        %708 = vmatpush2.bf16.xpose.msra.mxu0 0
        %709 = vmatprep.subr.bf16.mxu0 0
        %710 = vmatpush2.bf16.xpose.msra.mxu0 0
        %711 = vmatprep.subr.bf16.mxu0 0
        %712 = vmatpush2.bf16.xpose.msra.mxu0 0
        %713 = vmatprep.subr.bf16.mxu0 0
        %714 = vmatpush2.bf16.xpose.msra.mxu0 0
        %715 = vmatprep.subr.bf16.mxu0 0
        %716 = vmatpush2.bf16.xpose.msra.mxu0 0
        %717 = vmatprep.subr.bf16.mxu0 0
        %718 = vmatpush2.bf16.xpose.msra.mxu0 0
        %719 = vmatprep.subr.bf16.mxu0 0
        %720 = vmatpush2.bf16.xpose.msra.mxu0 0
        %721 = vmatprep.subr.bf16.mxu0 0
        %722 = vmatpush2.bf16.xpose.msra.mxu0 0
        %723 = vmatprep.mubr.bf16.mxu0 0
        %724 = vmatmul.mubr.bf16.gmra.mxu0 %v686
        %v725 = vpop.f32.mrf.mxu0
        %v726 = vadd.f32 0.0, %v725
        %v727 = vpop.f32.mrf.mxu0
        %v728 = vpop.f32.mrf.mxu0
        %v729 = vpop.f32.mrf.mxu0
        %730 = vdwg.mxu0
        %v731 = vmul.f32 %v726, 0.35355338
        %v732 = vadd.f32 %v731, %v680
        %v733 = vsel %vm684, %v732, -inf
        %734 = vmax.xlane.f32.xlu0 %v733
        %v735 = vpop.xlane.xlu0 %734
        %v736 = vsub.f32 %v732, %v735
        %v737 = vmul.f32 %v736, 1.442695
        %v738 = vpow.pop %v737
        %v739 = vsel %vm684, %v738, 0.0
        %740 = vadd.xlane.f32.xlu0 %v739
        %v741 = vpop.xlane.xlu0 %740
        %v742 = vrcp.pop %v741
        %v743 = vmul.f32 %v738, %v742
        %v744 = vpack.c.bf16 %v743, %v743
        %745 = vrot.lane.b32.xlu0 %v674, 64
        %v746 = vpop.permute.xlu0 %745
        %v748 = vsel %vm684, %v744, 0
        %vm750 = vcmask 1043456
        %v752 = vsel %vm750, %v746, 0
        %754 = vmatprep.subr.bf16.mxu0 0
        %755 = vmatpush1.bf16.msra.mxu0 0
        %756 = vmatprep.subr.bf16.mxu0 0
        %757 = vmatpush1.bf16.msra.mxu0 0
        %758 = vmatprep.subr.bf16.mxu0 0
        %759 = vmatpush1.bf16.msra.mxu0 0
        %760 = vmatprep.subr.bf16.mxu0 0
        %761 = vmatpush1.bf16.msra.mxu0 0
        %762 = vmatprep.subr.bf16.mxu0 0
        %763 = vmatpush1.bf16.msra.mxu0 0
        %764 = vmatprep.subr.bf16.mxu0 0
        %765 = vmatpush1.bf16.msra.mxu0 0
        %766 = vmatprep.subr.bf16.mxu0 0
        %767 = vmatpush1.bf16.msra.mxu0 0
        %768 = vmatprep.subr.bf16.mxu0 0
        %769 = vmatpush1.bf16.msra.mxu0 %v752
        %770 = vmatprep.subr.bf16.mxu0 0
        %771 = vmatpush2.bf16.msra.mxu0 0
        %772 = vmatprep.subr.bf16.mxu0 0
        %773 = vmatpush2.bf16.msra.mxu0 0
        %774 = vmatprep.subr.bf16.mxu0 0
        %775 = vmatpush2.bf16.msra.mxu0 0
        %776 = vmatprep.subr.bf16.mxu0 0
        %777 = vmatpush2.bf16.msra.mxu0 0
        %778 = vmatprep.subr.bf16.mxu0 0
        %779 = vmatpush2.bf16.msra.mxu0 0
        %780 = vmatprep.subr.bf16.mxu0 0
        %781 = vmatpush2.bf16.msra.mxu0 0
        %782 = vmatprep.subr.bf16.mxu0 0
        %783 = vmatpush2.bf16.msra.mxu0 0
        %784 = vmatprep.subr.bf16.mxu0 0
        %785 = vmatpush2.bf16.msra.mxu0 0
        %786 = vmatprep.mubr.bf16.mxu0 0
        %787 = vmatmul.mubr.bf16.gmra.mxu0 %v748
        %v788 = vpop.f32.mrf.mxu0
        %v789 = vadd.f32 0.0, %v788
        %v790 = vpop.f32.mrf.mxu0
        %v791 = vpop.f32.mrf.mxu0
        %v792 = vpop.f32.mrf.mxu0
        %793 = vdwg.mxu0
        %794 = vst.msk [vmem:[#allocation3] sm:$0xff] %vm684, %v789
        %795 = vrot.lane.b32.xlu0 %v674, 120
        %v796 = vpop.permute.xlu0 %795
        %797 = vrot.lane.b32.xlu0 %v674, 88
        %v798 = vpop.permute.xlu0 %797
        %v800 = vsel %vm684, %v796, 0
        %v803 = vsel %vm684, %v798, 0
        %805 = vmatprep.subr.bf16.mxu0 0
        %806 = vmatpush1.bf16.xpose.msra.mxu0 0
        %807 = vmatprep.subr.bf16.mxu0 0
        %808 = vmatpush1.bf16.xpose.msra.mxu0 0
        %809 = vmatprep.subr.bf16.mxu0 0
        %810 = vmatpush1.bf16.xpose.msra.mxu0 0
        %811 = vmatprep.subr.bf16.mxu0 0
        %812 = vmatpush1.bf16.xpose.msra.mxu0 0
        %813 = vmatprep.subr.bf16.mxu0 0
        %814 = vmatpush1.bf16.xpose.msra.mxu0 0
        %815 = vmatprep.subr.bf16.mxu0 0
        %816 = vmatpush1.bf16.xpose.msra.mxu0 0
        %817 = vmatprep.subr.bf16.mxu0 0
        %818 = vmatpush1.bf16.xpose.msra.mxu0 0
        %819 = vmatprep.subr.bf16.mxu0 0
        %820 = vmatpush1.bf16.xpose.msra.mxu0 %v803
        %821 = vmatprep.subr.bf16.mxu0 0
        %822 = vmatpush2.bf16.xpose.msra.mxu0 0
        %823 = vmatprep.subr.bf16.mxu0 0
        %824 = vmatpush2.bf16.xpose.msra.mxu0 0
        %825 = vmatprep.subr.bf16.mxu0 0
        %826 = vmatpush2.bf16.xpose.msra.mxu0 0
        %827 = vmatprep.subr.bf16.mxu0 0
        %828 = vmatpush2.bf16.xpose.msra.mxu0 0
        %829 = vmatprep.subr.bf16.mxu0 0
        %830 = vmatpush2.bf16.xpose.msra.mxu0 0
        %831 = vmatprep.subr.bf16.mxu0 0
        %832 = vmatpush2.bf16.xpose.msra.mxu0 0
        %833 = vmatprep.subr.bf16.mxu0 0
        %834 = vmatpush2.bf16.xpose.msra.mxu0 0
        %835 = vmatprep.subr.bf16.mxu0 0
        %836 = vmatpush2.bf16.xpose.msra.mxu0 0
        %837 = vmatprep.mubr.bf16.mxu0 0
        %838 = vmatmul.mubr.bf16.gmra.mxu0 %v800
        %v839 = vpop.f32.mrf.mxu0
        %v840 = vadd.f32 0.0, %v839
        %v841 = vpop.f32.mrf.mxu0
        %v842 = vpop.f32.mrf.mxu0
        %v843 = vpop.f32.mrf.mxu0
        %844 = vdwg.mxu0
        %v845 = vmul.f32 %v840, 0.35355338
        %v846 = vadd.f32 %v845, %v680
        %v847 = vsel %vm684, %v846, -inf
        %848 = vmax.xlane.f32.xlu0 %v847
        %v849 = vpop.xlane.xlu0 %848
        %v850 = vsub.f32 %v846, %v849
        %v851 = vmul.f32 %v850, 1.442695
        %v852 = vpow.pop %v851
        %v853 = vsel %vm684, %v852, 0.0
        %854 = vadd.xlane.f32.xlu0 %v853
        %v855 = vpop.xlane.xlu0 %854
        %v856 = vrcp.pop %v855
        %v857 = vmul.f32 %v852, %v856
        %v858 = vpack.c.bf16 %v857, %v857
        %859 = vrot.lane.b32.xlu0 %v674, 56
        %v860 = vpop.permute.xlu0 %859
        %v862 = vsel %vm684, %v858, 0
        %v865 = vsel %vm750, %v860, 0
        %867 = vmatprep.subr.bf16.mxu0 0
        %868 = vmatpush1.bf16.msra.mxu0 0
        %869 = vmatprep.subr.bf16.mxu0 0
        %870 = vmatpush1.bf16.msra.mxu0 0
        %871 = vmatprep.subr.bf16.mxu0 0
        %872 = vmatpush1.bf16.msra.mxu0 0
        %873 = vmatprep.subr.bf16.mxu0 0
        %874 = vmatpush1.bf16.msra.mxu0 0
        %875 = vmatprep.subr.bf16.mxu0 0
        %876 = vmatpush1.bf16.msra.mxu0 0
        %877 = vmatprep.subr.bf16.mxu0 0
        %878 = vmatpush1.bf16.msra.mxu0 0
        %879 = vmatprep.subr.bf16.mxu0 0
        %880 = vmatpush1.bf16.msra.mxu0 0
        %881 = vmatprep.subr.bf16.mxu0 0
        %882 = vmatpush1.bf16.msra.mxu0 %v865
        %883 = vmatprep.subr.bf16.mxu0 0
        %884 = vmatpush2.bf16.msra.mxu0 0
        %885 = vmatprep.subr.bf16.mxu0 0
        %886 = vmatpush2.bf16.msra.mxu0 0
        %887 = vmatprep.subr.bf16.mxu0 0
        %888 = vmatpush2.bf16.msra.mxu0 0
        %889 = vmatprep.subr.bf16.mxu0 0
        %890 = vmatpush2.bf16.msra.mxu0 0
        %891 = vmatprep.subr.bf16.mxu0 0
        %892 = vmatpush2.bf16.msra.mxu0 0
        %893 = vmatprep.subr.bf16.mxu0 0
        %894 = vmatpush2.bf16.msra.mxu0 0
        %895 = vmatprep.subr.bf16.mxu0 0
        %896 = vmatpush2.bf16.msra.mxu0 0
        %897 = vmatprep.subr.bf16.mxu0 0
        %898 = vmatpush2.bf16.msra.mxu0 0
        %899 = vmatprep.mubr.bf16.mxu0 0
        %900 = vmatmul.mubr.bf16.gmra.mxu0 %v862
        %v901 = vpop.f32.mrf.mxu0
        %v902 = vadd.f32 0.0, %v901
        %v903 = vpop.f32.mrf.mxu0
        %v904 = vpop.f32.mrf.mxu0
        %v905 = vpop.f32.mrf.mxu0
        %906 = vdwg.mxu0
        %908 = vrot.lane.b32.xlu0 %v902, 8
        %v909 = vpop.permute.xlu0 %908
        %vm911 = vcmask 130112
        %912 = vst.msk [vmem:[#allocation3] sm:$0xff] %vm911, %v909
        %913 = vrot.lane.b32.xlu0 %v674, 112
        %v914 = vpop.permute.xlu0 %913
        %915 = vrot.lane.b32.xlu0 %v674, 80
        %v916 = vpop.permute.xlu0 %915
        %v918 = vsel %vm684, %v914, 0
        %v921 = vsel %vm684, %v916, 0
        %923 = vmatprep.subr.bf16.mxu0 0
        %924 = vmatpush1.bf16.xpose.msra.mxu0 0
        %925 = vmatprep.subr.bf16.mxu0 0
        %926 = vmatpush1.bf16.xpose.msra.mxu0 0
        %927 = vmatprep.subr.bf16.mxu0 0
        %928 = vmatpush1.bf16.xpose.msra.mxu0 0
        %929 = vmatprep.subr.bf16.mxu0 0
        %930 = vmatpush1.bf16.xpose.msra.mxu0 0
        %931 = vmatprep.subr.bf16.mxu0 0
        %932 = vmatpush1.bf16.xpose.msra.mxu0 0
        %933 = vmatprep.subr.bf16.mxu0 0
        %934 = vmatpush1.bf16.xpose.msra.mxu0 0
        %935 = vmatprep.subr.bf16.mxu0 0
        %936 = vmatpush1.bf16.xpose.msra.mxu0 0
        %937 = vmatprep.subr.bf16.mxu0 0
        %938 = vmatpush1.bf16.xpose.msra.mxu0 %v921
        %939 = vmatprep.subr.bf16.mxu0 0
        %940 = vmatpush2.bf16.xpose.msra.mxu0 0
        %941 = vmatprep.subr.bf16.mxu0 0
        %942 = vmatpush2.bf16.xpose.msra.mxu0 0
        %943 = vmatprep.subr.bf16.mxu0 0
        %944 = vmatpush2.bf16.xpose.msra.mxu0 0
        %945 = vmatprep.subr.bf16.mxu0 0
        %946 = vmatpush2.bf16.xpose.msra.mxu0 0
        %947 = vmatprep.subr.bf16.mxu0 0
        %948 = vmatpush2.bf16.xpose.msra.mxu0 0
        %949 = vmatprep.subr.bf16.mxu0 0
        %950 = vmatpush2.bf16.xpose.msra.mxu0 0
        %951 = vmatprep.subr.bf16.mxu0 0
        %952 = vmatpush2.bf16.xpose.msra.mxu0 0
        %953 = vmatprep.subr.bf16.mxu0 0
        %954 = vmatpush2.bf16.xpose.msra.mxu0 0
        %955 = vmatprep.mubr.bf16.mxu0 0
        %956 = vmatmul.mubr.bf16.gmra.mxu0 %v918
        %v957 = vpop.f32.mrf.mxu0
        %v958 = vadd.f32 0.0, %v957
        %v959 = vpop.f32.mrf.mxu0
        %v960 = vpop.f32.mrf.mxu0
        %v961 = vpop.f32.mrf.mxu0
        %962 = vdwg.mxu0
        %v963 = vmul.f32 %v958, 0.35355338
        %v964 = vadd.f32 %v963, %v680
        %v965 = vsel %vm684, %v964, -inf
        %966 = vmax.xlane.f32.xlu0 %v965
        %v967 = vpop.xlane.xlu0 %966
        %v968 = vsub.f32 %v964, %v967
        %v969 = vmul.f32 %v968, 1.442695
        %v970 = vpow.pop %v969
        %v971 = vsel %vm684, %v970, 0.0
        %972 = vadd.xlane.f32.xlu0 %v971
        %v973 = vpop.xlane.xlu0 %972
        %v974 = vrcp.pop %v973
        %v975 = vmul.f32 %v970, %v974
        %v976 = vpack.c.bf16 %v975, %v975
        %977 = vrot.lane.b32.xlu0 %v674, 48
        %v978 = vpop.permute.xlu0 %977
        %v980 = vsel %vm684, %v976, 0
        %v983 = vsel %vm750, %v978, 0
        %985 = vmatprep.subr.bf16.mxu0 0
        %986 = vmatpush1.bf16.msra.mxu0 0
        %987 = vmatprep.subr.bf16.mxu0 0
        %988 = vmatpush1.bf16.msra.mxu0 0
        %989 = vmatprep.subr.bf16.mxu0 0
        %990 = vmatpush1.bf16.msra.mxu0 0
        %991 = vmatprep.subr.bf16.mxu0 0
        %992 = vmatpush1.bf16.msra.mxu0 0
        %993 = vmatprep.subr.bf16.mxu0 0
        %994 = vmatpush1.bf16.msra.mxu0 0
        %995 = vmatprep.subr.bf16.mxu0 0
        %996 = vmatpush1.bf16.msra.mxu0 0
        %997 = vmatprep.subr.bf16.mxu0 0
        %998 = vmatpush1.bf16.msra.mxu0 0
        %999 = vmatprep.subr.bf16.mxu0 0
        %1000 = vmatpush1.bf16.msra.mxu0 %v983
        %1001 = vmatprep.subr.bf16.mxu0 0
        %1002 = vmatpush2.bf16.msra.mxu0 0
        %1003 = vmatprep.subr.bf16.mxu0 0
        %1004 = vmatpush2.bf16.msra.mxu0 0
        %1005 = vmatprep.subr.bf16.mxu0 0
        %1006 = vmatpush2.bf16.msra.mxu0 0
        %1007 = vmatprep.subr.bf16.mxu0 0
        %1008 = vmatpush2.bf16.msra.mxu0 0
        %1009 = vmatprep.subr.bf16.mxu0 0
        %1010 = vmatpush2.bf16.msra.mxu0 0
        %1011 = vmatprep.subr.bf16.mxu0 0
        %1012 = vmatpush2.bf16.msra.mxu0 0
        %1013 = vmatprep.subr.bf16.mxu0 0
        %1014 = vmatpush2.bf16.msra.mxu0 0
        %1015 = vmatprep.subr.bf16.mxu0 0
        %1016 = vmatpush2.bf16.msra.mxu0 0
        %1017 = vmatprep.mubr.bf16.mxu0 0
        %1018 = vmatmul.mubr.bf16.gmra.mxu0 %v980
        %v1019 = vpop.f32.mrf.mxu0
        %v1020 = vadd.f32 0.0, %v1019
        %v1021 = vpop.f32.mrf.mxu0
        %v1022 = vpop.f32.mrf.mxu0
        %v1023 = vpop.f32.mrf.mxu0
        %1024 = vdwg.mxu0
        %1026 = vrot.lane.b32.xlu0 %v1020, 16
        %v1027 = vpop.permute.xlu0 %1026
        %vm1029 = vcmask 195712
        %1030 = vst.msk [vmem:[#allocation3] sm:$0xff] %vm1029, %v1027
        %1031 = vrot.lane.b32.xlu0 %v674, 104
        %v1032 = vpop.permute.xlu0 %1031
        %1033 = vrot.lane.b32.xlu0 %v674, 72
        %v1034 = vpop.permute.xlu0 %1033
        %v1036 = vsel %vm684, %v1032, 0
        %v1039 = vsel %vm684, %v1034, 0
        %1041 = vmatprep.subr.bf16.mxu0 0
        %1042 = vmatpush1.bf16.xpose.msra.mxu0 0
        %1043 = vmatprep.subr.bf16.mxu0 0
        %1044 = vmatpush1.bf16.xpose.msra.mxu0 0
        %1045 = vmatprep.subr.bf16.mxu0 0
        %1046 = vmatpush1.bf16.xpose.msra.mxu0 0
        %1047 = vmatprep.subr.bf16.mxu0 0
        %1048 = vmatpush1.bf16.xpose.msra.mxu0 0
        %1049 = vmatprep.subr.bf16.mxu0 0
        %1050 = vmatpush1.bf16.xpose.msra.mxu0 0
        %1051 = vmatprep.subr.bf16.mxu0 0
        %1052 = vmatpush1.bf16.xpose.msra.mxu0 0
        %1053 = vmatprep.subr.bf16.mxu0 0
        %1054 = vmatpush1.bf16.xpose.msra.mxu0 0
        %1055 = vmatprep.subr.bf16.mxu0 0
        %1056 = vmatpush1.bf16.xpose.msra.mxu0 %v1039
        %1057 = vmatprep.subr.bf16.mxu0 0
        %1058 = vmatpush2.bf16.xpose.msra.mxu0 0
        %1059 = vmatprep.subr.bf16.mxu0 0
        %1060 = vmatpush2.bf16.xpose.msra.mxu0 0
        %1061 = vmatprep.subr.bf16.mxu0 0
        %1062 = vmatpush2.bf16.xpose.msra.mxu0 0
        %1063 = vmatprep.subr.bf16.mxu0 0
        %1064 = vmatpush2.bf16.xpose.msra.mxu0 0
        %1065 = vmatprep.subr.bf16.mxu0 0
        %1066 = vmatpush2.bf16.xpose.msra.mxu0 0
        %1067 = vmatprep.subr.bf16.mxu0 0
        %1068 = vmatpush2.bf16.xpose.msra.mxu0 0
        %1069 = vmatprep.subr.bf16.mxu0 0
        %1070 = vmatpush2.bf16.xpose.msra.mxu0 0
        %1071 = vmatprep.subr.bf16.mxu0 0
        %1072 = vmatpush2.bf16.xpose.msra.mxu0 0
        %1073 = vmatprep.mubr.bf16.mxu0 0
        %1074 = vmatmul.mubr.bf16.gmra.mxu0 %v1036
        %v1075 = vpop.f32.mrf.mxu0
        %v1076 = vadd.f32 0.0, %v1075
        %v1077 = vpop.f32.mrf.mxu0
        %v1078 = vpop.f32.mrf.mxu0
        %v1079 = vpop.f32.mrf.mxu0
        %1080 = vdwg.mxu0
        %v1081 = vmul.f32 %v1076, 0.35355338
        %v1082 = vadd.f32 %v1081, %v680
        %v1083 = vsel %vm684, %v1082, -inf
        %1084 = vmax.xlane.f32.xlu0 %v1083
        %v1085 = vpop.xlane.xlu0 %1084
        %v1086 = vsub.f32 %v1082, %v1085
        %v1087 = vmul.f32 %v1086, 1.442695
        %v1088 = vpow.pop %v1087
        %v1089 = vsel %vm684, %v1088, 0.0
        %1090 = vadd.xlane.f32.xlu0 %v1089
        %v1091 = vpop.xlane.xlu0 %1090
        %v1092 = vrcp.pop %v1091
        %v1093 = vmul.f32 %v1088, %v1092
        %v1094 = vpack.c.bf16 %v1093, %v1093
        %1095 = vrot.lane.b32.xlu0 %v674, 40
        %v1096 = vpop.permute.xlu0 %1095
        %v1098 = vsel %vm684, %v1094, 0
        %v1101 = vsel %vm750, %v1096, 0
        %1103 = vmatprep.subr.bf16.mxu0 0
        %1104 = vmatpush1.bf16.msra.mxu0 0
        %1105 = vmatprep.subr.bf16.mxu0 0
        %1106 = vmatpush1.bf16.msra.mxu0 0
        %1107 = vmatprep.subr.bf16.mxu0 0
        %1108 = vmatpush1.bf16.msra.mxu0 0
        %1109 = vmatprep.subr.bf16.mxu0 0
        %1110 = vmatpush1.bf16.msra.mxu0 0
        %1111 = vmatprep.subr.bf16.mxu0 0
        %1112 = vmatpush1.bf16.msra.mxu0 0
        %1113 = vmatprep.subr.bf16.mxu0 0
        %1114 = vmatpush1.bf16.msra.mxu0 0
        %1115 = vmatprep.subr.bf16.mxu0 0
        %1116 = vmatpush1.bf16.msra.mxu0 0
        %1117 = vmatprep.subr.bf16.mxu0 0
        %1118 = vmatpush1.bf16.msra.mxu0 %v1101
        %1119 = vmatprep.subr.bf16.mxu0 0
        %1120 = vmatpush2.bf16.msra.mxu0 0
        %1121 = vmatprep.subr.bf16.mxu0 0
        %1122 = vmatpush2.bf16.msra.mxu0 0
        %1123 = vmatprep.subr.bf16.mxu0 0
        %1124 = vmatpush2.bf16.msra.mxu0 0
        %1125 = vmatprep.subr.bf16.mxu0 0
        %1126 = vmatpush2.bf16.msra.mxu0 0
        %1127 = vmatprep.subr.bf16.mxu0 0
        %1128 = vmatpush2.bf16.msra.mxu0 0
        %1129 = vmatprep.subr.bf16.mxu0 0
        %1130 = vmatpush2.bf16.msra.mxu0 0
        %1131 = vmatprep.subr.bf16.mxu0 0
        %1132 = vmatpush2.bf16.msra.mxu0 0
        %1133 = vmatprep.subr.bf16.mxu0 0
        %1134 = vmatpush2.bf16.msra.mxu0 0
        %1135 = vmatprep.mubr.bf16.mxu0 0
        %1136 = vmatmul.mubr.bf16.gmra.mxu0 %v1098
        %v1137 = vpop.f32.mrf.mxu0
        %v1138 = vadd.f32 0.0, %v1137
        %v1139 = vpop.f32.mrf.mxu0
        %v1140 = vpop.f32.mrf.mxu0
        %v1141 = vpop.f32.mrf.mxu0
        %1142 = vdwg.mxu0
        %1144 = vrot.lane.b32.xlu0 %v1138, 24
        %v1145 = vpop.permute.xlu0 %1144
        %vm1147 = vcmask 261312
        %1148 = vst.msk [vmem:[#allocation3] sm:$0xff] %vm1147, %v1145
        %v1149 = vld [vmem:[#allocation3] sm:$0xff]
        %s1150 = smul.addr %s594, 4
        %s1151 = scalar_lea.vmem %s6, %s1150
        %v1152 = vld [vmem:[%s1151] sm:$0xf]
        %v1153 = vld [vmem:[%s1151 + $0x4] sm:$0xf]
        %v1154 = vld [vmem:[%s1151 + $0x8] sm:$0xf]
        %v1155 = vld [vmem:[%s1151 + $0xc] sm:$0xf]
        %v1156 = vpack.c.bf16 %v1149, %v1149
        %v1161 = vunpack.c.l.b16 %v1152
        %v1162 = vunpack.c.l.b16 %v1153
        %v1163 = vunpack.c.l.b16 %v1154
        %v1164 = vunpack.c.l.b16 %v1155
        %v1165 = vpack.c.b16 %v1162, %v1161
        %v1166 = vpack.c.b16 %v1164, %v1163
        %v1170 = vsel %vm598, %v1156, 0
        %1172 = vmatprep.subr.bf16.mxu0 0
        %1173 = vmatpush1.bf16.msra.mxu0 0
        %1174 = vmatprep.subr.bf16.mxu0 0
        %1175 = vmatpush1.bf16.msra.mxu0 0
        %1176 = vmatprep.subr.bf16.mxu0 0
        %1177 = vmatpush1.bf16.msra.mxu0 0
        %1178 = vmatprep.subr.bf16.mxu0 0
        %1179 = vmatpush1.bf16.msra.mxu0 0
        %1180 = vmatprep.subr.bf16.mxu0 0
        %1181 = vmatpush1.bf16.msra.mxu0 0
        %1182 = vmatprep.subr.bf16.mxu0 0
        %1183 = vmatpush1.bf16.msra.mxu0 0
        %1184 = vmatprep.subr.bf16.mxu0 0
        %1185 = vmatpush1.bf16.msra.mxu0 %v1166
        %1186 = vmatprep.subr.bf16.mxu0 0
        %1187 = vmatpush1.bf16.msra.mxu0 %v1165
        %1188 = vmatprep.subr.bf16.mxu0 0
        %1189 = vmatpush2.bf16.msra.mxu0 0
        %1190 = vmatprep.subr.bf16.mxu0 0
        %1191 = vmatpush2.bf16.msra.mxu0 0
        %1192 = vmatprep.subr.bf16.mxu0 0
        %1193 = vmatpush2.bf16.msra.mxu0 0
        %1194 = vmatprep.subr.bf16.mxu0 0
        %1195 = vmatpush2.bf16.msra.mxu0 0
        %1196 = vmatprep.subr.bf16.mxu0 0
        %1197 = vmatpush2.bf16.msra.mxu0 0
        %1198 = vmatprep.subr.bf16.mxu0 0
        %1199 = vmatpush2.bf16.msra.mxu0 0
        %1200 = vmatprep.subr.bf16.mxu0 0
        %1201 = vmatpush2.bf16.msra.mxu0 0
        %1202 = vmatprep.subr.bf16.mxu0 0
        %1203 = vmatpush2.bf16.msra.mxu0 0
        %1204 = vmatprep.mubr.bf16.mxu0 0
        %1205 = vmatmul.mubr.bf16.gmra.mxu0 %v1170
        %v1206 = vpop.f32.mrf.mxu0
        %v1207 = vadd.f32 0.0, %v1206
        %v1208 = vpop.f32.mrf.mxu0
        %v1209 = vpop.f32.mrf.mxu0
        %v1210 = vpop.f32.mrf.mxu0
        %1211 = vdwg.mxu0
        %v1212 = vadd.f32 %v593, %v1207
        %v1213 = vmul.f32 %v1212, %v1212
        %v1214 = vsel %vm598, %v1213, 0.0
        %1215 = vadd.xlane.f32.xlu0 %v1214
        %v1216 = vpop.xlane.xlu0 %1215
        %v1217 = vmul.f32 %v1216, %v602
        %v1218 = vadd.f32 %v1217, 1e-06
        %v1219 = vrsqrt.pop %v1218
        %v1220 = vmul.f32 %v1212, %v1219
        %v1221 = vlaneseq
        %v1222 = vshrl.u32 %v1221, 7
        %v1223 = vsub.s32 1, %v1222
        %v1224 = vrot.slane %v596, %v1223
        %v1225 = vmul.f32 %v1220, %v1224
        %v1226 = vmul.f32 %v1225, %v1225
        %v1227 = vsel %vm598, %v1226, 0.0
        %1228 = vadd.xlane.f32.xlu0 %v1227
        %v1229 = vpop.xlane.xlu0 %1228
        %v1230 = vmul.f32 %v1229, %v602
        %v1231 = vadd.f32 %v1230, 1e-06
        %v1232 = vrsqrt.pop %v1231
        %v1233 = vmul.f32 %v1225, %v1232
        %v1234 = vlaneseq
        %v1235 = vshrl.u32 %v1234, 7
        %v1236 = vsub.s32 2, %v1235
        %v1237 = vrot.slane %v596, %v1236
        %v1238 = vmul.f32 %v1233, %v1237
        %s1239 = smul.addr %s594, 4
        %s1240 = scalar_lea.vmem %s7, %s1239
        %v1241 = vld [vmem:[%s1240] sm:$0xf]
        %v1242 = vld [vmem:[%s1240 + $0x4] sm:$0xf]
        %v1243 = vld [vmem:[%s1240 + $0x8] sm:$0xf]
        %v1244 = vld [vmem:[%s1240 + $0xc] sm:$0xf]
        %v1245 = vpack.c.bf16 %v1238, %v1238
        %v1250 = vunpack.c.l.b16 %v1241
        %v1251 = vunpack.c.l.b16 %v1242
        %v1252 = vunpack.c.l.b16 %v1243
        %v1253 = vunpack.c.l.b16 %v1244
        %v1254 = vpack.c.b16 %v1251, %v1250
        %v1255 = vpack.c.b16 %v1253, %v1252
        %v1259 = vsel %vm598, %v1245, 0
        %1261 = vmatprep.subr.bf16.mxu0 0
        %1262 = vmatpush1.bf16.msra.mxu0 0
        %1263 = vmatprep.subr.bf16.mxu0 0
        %1264 = vmatpush1.bf16.msra.mxu0 0
        %1265 = vmatprep.subr.bf16.mxu0 0
        %1266 = vmatpush1.bf16.msra.mxu0 0
        %1267 = vmatprep.subr.bf16.mxu0 0
        %1268 = vmatpush1.bf16.msra.mxu0 0
        %1269 = vmatprep.subr.bf16.mxu0 0
        %1270 = vmatpush1.bf16.msra.mxu0 0
        %1271 = vmatprep.subr.bf16.mxu0 0
        %1272 = vmatpush1.bf16.msra.mxu0 0
        %1273 = vmatprep.subr.bf16.mxu0 0
        %1274 = vmatpush1.bf16.msra.mxu0 %v1255
        %1275 = vmatprep.subr.bf16.mxu0 0
        %1276 = vmatpush1.bf16.msra.mxu0 %v1254
        %1277 = vmatprep.subr.bf16.mxu0 0
        %1278 = vmatpush2.bf16.msra.mxu0 0
        %1279 = vmatprep.subr.bf16.mxu0 0
        %1280 = vmatpush2.bf16.msra.mxu0 0
        %1281 = vmatprep.subr.bf16.mxu0 0
        %1282 = vmatpush2.bf16.msra.mxu0 0
        %1283 = vmatprep.subr.bf16.mxu0 0
        %1284 = vmatpush2.bf16.msra.mxu0 0
        %1285 = vmatprep.subr.bf16.mxu0 0
        %1286 = vmatpush2.bf16.msra.mxu0 0
        %1287 = vmatprep.subr.bf16.mxu0 0
        %1288 = vmatpush2.bf16.msra.mxu0 0
        %1289 = vmatprep.subr.bf16.mxu0 0
        %1290 = vmatpush2.bf16.msra.mxu0 0
        %1291 = vmatprep.subr.bf16.mxu0 0
        %1292 = vmatpush2.bf16.msra.mxu0 0
        %1293 = vmatprep.mubr.bf16.mxu0 0
        %1294 = vmatmul.mubr.bf16.gmra.mxu0 %v1259
        %v1295 = vpop.f32.mrf.mxu0
        %v1296 = vadd.f32 0.0, %v1295
        %v1297 = vpop.f32.mrf.mxu0
        %v1298 = vpop.f32.mrf.mxu0
        %v1299 = vpop.f32.mrf.mxu0
        %1300 = vdwg.mxu0
        %s1301 = smul.addr %s594, 4
        %s1302 = scalar_lea.vmem [#allocation12], %s1301
        %v1303 = vld [vmem:[%s1302] sm:$0xf]
        %v1304 = vld [vmem:[%s1302 + $0x4] sm:$0xf]
        %v1305 = vld [vmem:[%s1302 + $0x8] sm:$0xf]
        %v1306 = vld [vmem:[%s1302 + $0xc] sm:$0xf]
        %v1311 = vunpack.c.l.b16 %v1303
        %v1312 = vunpack.c.l.b16 %v1304
        %v1313 = vunpack.c.l.b16 %v1305
        %v1314 = vunpack.c.l.b16 %v1306
        %v1315 = vpack.c.b16 %v1312, %v1311
        %v1316 = vpack.c.b16 %v1314, %v1313
        %1319 = vmatprep.subr.bf16.mxu0 0
        %1320 = vmatpush1.bf16.msra.mxu0 0
        %1321 = vmatprep.subr.bf16.mxu0 0
        %1322 = vmatpush1.bf16.msra.mxu0 0
        %1323 = vmatprep.subr.bf16.mxu0 0
        %1324 = vmatpush1.bf16.msra.mxu0 0
        %1325 = vmatprep.subr.bf16.mxu0 0
        %1326 = vmatpush1.bf16.msra.mxu0 0
        %1327 = vmatprep.subr.bf16.mxu0 0
        %1328 = vmatpush1.bf16.msra.mxu0 0
        %1329 = vmatprep.subr.bf16.mxu0 0
        %1330 = vmatpush1.bf16.msra.mxu0 0
        %1331 = vmatprep.subr.bf16.mxu0 0
        %1332 = vmatpush1.bf16.msra.mxu0 %v1316
        %1333 = vmatprep.subr.bf16.mxu0 0
        %1334 = vmatpush1.bf16.msra.mxu0 %v1315
        %1335 = vmatprep.subr.bf16.mxu0 0
        %1336 = vmatpush2.bf16.msra.mxu0 0
        %1337 = vmatprep.subr.bf16.mxu0 0
        %1338 = vmatpush2.bf16.msra.mxu0 0
        %1339 = vmatprep.subr.bf16.mxu0 0
        %1340 = vmatpush2.bf16.msra.mxu0 0
        %1341 = vmatprep.subr.bf16.mxu0 0
        %1342 = vmatpush2.bf16.msra.mxu0 0
        %1343 = vmatprep.subr.bf16.mxu0 0
        %1344 = vmatpush2.bf16.msra.mxu0 0
        %1345 = vmatprep.subr.bf16.mxu0 0
        %1346 = vmatpush2.bf16.msra.mxu0 0
        %1347 = vmatprep.subr.bf16.mxu0 0
        %1348 = vmatpush2.bf16.msra.mxu0 0
        %1349 = vmatprep.subr.bf16.mxu0 0
        %1350 = vmatpush2.bf16.msra.mxu0 0
        %1351 = vmatprep.mubr.bf16.mxu0 0
        %1352 = vmatmul.mubr.bf16.gmra.mxu0 %v1259
        %v1353 = vpop.f32.mrf.mxu0
        %v1354 = vadd.f32 0.0, %v1353
        %v1355 = vpop.f32.mrf.mxu0
        %v1356 = vpop.f32.mrf.mxu0
        %v1357 = vpop.f32.mrf.mxu0
        %1358 = vdwg.mxu0
        %v1359 = vxor.u32 %v1296, 2147483648
        %v1360 = vmul.f32 %v1359, 1.442695
        %v1361 = vpow.pop %v1360
        %v1362 = vadd.f32 %v1361, 1.0
        %v1363 = vrcp.pop %v1362
        %v1364 = vmul.f32 1.0, %v1363
        %v1365 = vmul.f32 %v1296, %v1364
        %v1366 = vmul.f32 %v1365, %v1354
        %s1367 = smul.u32 %s43, 8
        %s1368 = smul.addr %s1367, 4
        %s1369 = scalar_lea.vmem %s9, %s1368
        %v1370 = vld [vmem:[%s1369] sm:$0xf]
        %v1371 = vld [vmem:[%s1369 + $0x4] sm:$0xf]
        %v1372 = vld [vmem:[%s1369 + $0x8] sm:$0xf]
        %v1373 = vld [vmem:[%s1369 + $0xc] sm:$0xf]
        %v1374 = vld [vmem:[%s1369 + $0x10] sm:$0xf]
        %v1375 = vld [vmem:[%s1369 + $0x14] sm:$0xf]
        %v1376 = vld [vmem:[%s1369 + $0x18] sm:$0xf]
        %v1377 = vld [vmem:[%s1369 + $0x1c] sm:$0xf]
        %v1378 = vpack.c.bf16 %v1366, %v1366
        %v1387 = vunpack.c.l.b16 %v1370
        %v1388 = vunpack.c.l.b16 %v1371
        %v1389 = vunpack.c.l.b16 %v1372
        %v1390 = vunpack.c.l.b16 %v1373
        %v1391 = vunpack.c.l.b16 %v1374
        %v1392 = vunpack.c.l.b16 %v1375
        %v1393 = vunpack.c.l.b16 %v1376
        %v1394 = vunpack.c.l.b16 %v1377
        %v1395 = vpack.c.b16 %v1388, %v1387
        %v1396 = vpack.c.b16 %v1390, %v1389
        %v1397 = vpack.c.b16 %v1392, %v1391
        %v1398 = vpack.c.b16 %v1394, %v1393
        %vm1403 = vcmask 523264
        %v1405 = vsel %vm1403, %v1378, 0
        %1407 = vmatprep.subr.bf16.mxu0 0
        %1408 = vmatpush1.bf16.msra.mxu0 0
        %1409 = vmatprep.subr.bf16.mxu0 0
        %1410 = vmatpush1.bf16.msra.mxu0 0
        %1411 = vmatprep.subr.bf16.mxu0 0
        %1412 = vmatpush1.bf16.msra.mxu0 0
        %1413 = vmatprep.subr.bf16.mxu0 0
        %1414 = vmatpush1.bf16.msra.mxu0 0
        %1415 = vmatprep.subr.bf16.mxu0 0
        %1416 = vmatpush1.bf16.msra.mxu0 %v1398
        %1417 = vmatprep.subr.bf16.mxu0 0
        %1418 = vmatpush1.bf16.msra.mxu0 %v1397
        %1419 = vmatprep.subr.bf16.mxu0 0
        %1420 = vmatpush1.bf16.msra.mxu0 %v1396
        %1421 = vmatprep.subr.bf16.mxu0 0
        %1422 = vmatpush1.bf16.msra.mxu0 %v1395
        %1423 = vmatprep.subr.bf16.mxu0 0
        %1424 = vmatpush2.bf16.msra.mxu0 0
        %1425 = vmatprep.subr.bf16.mxu0 0
        %1426 = vmatpush2.bf16.msra.mxu0 0
        %1427 = vmatprep.subr.bf16.mxu0 0
        %1428 = vmatpush2.bf16.msra.mxu0 0
        %1429 = vmatprep.subr.bf16.mxu0 0
        %1430 = vmatpush2.bf16.msra.mxu0 0
        %1431 = vmatprep.subr.bf16.mxu0 0
        %1432 = vmatpush2.bf16.msra.mxu0 0
        %1433 = vmatprep.subr.bf16.mxu0 0
        %1434 = vmatpush2.bf16.msra.mxu0 0
        %1435 = vmatprep.subr.bf16.mxu0 0
        %1436 = vmatpush2.bf16.msra.mxu0 0
        %1437 = vmatprep.subr.bf16.mxu0 0
        %1438 = vmatpush2.bf16.msra.mxu0 0
        %1439 = vmatprep.mubr.bf16.mxu0 0
        %1440 = vmatmul.mubr.bf16.gmra.mxu0 %v1405
        %v1441 = vpop.f32.mrf.mxu0
        %v1442 = vadd.f32 0.0, %v1441
        %v1443 = vpop.f32.mrf.mxu0
        %v1444 = vpop.f32.mrf.mxu0
        %v1445 = vpop.f32.mrf.mxu0
        %1446 = vdwg.mxu0
        %v1447 = vadd.f32 %v1225, %v1442
        %v1448 = vmul.f32 %v1447, %v1447
        %v1449 = vsel %vm598, %v1448, 0.0
        %1450 = vadd.xlane.f32.xlu0 %v1449
        %v1451 = vpop.xlane.xlu0 %1450
        %v1452 = vmul.f32 %v1451, %v602
        %v1453 = vadd.f32 %v1452, 1e-06
        %v1454 = vrsqrt.pop %v1453
        %v1455 = vmul.f32 %v1447, %v1454
        %v1456 = vlaneseq
        %v1457 = vshrl.u32 %v1456, 7
        %v1458 = vsub.s32 3, %v1457
        %v1459 = vrot.slane %v596, %v1458
        %v1460 = vmul.f32 %v1455, %v1459
        %1461 = vst.msk [vmem:[#allocation2] sm:$0xff] %vm598, %v1460
        %p1462 = scmp.eq.s32.totalorder %s42, 3
        %p1463 = scmp.eq.s32.totalorder %s43, 1
        %p1464 = pnand %p1462, %p1463
        %p1465 = pneg %p1464
        // Predicated region
        $region89: #{tpu_custom_call.1} parent=59 // pred_check
          _
        $region90: #{tpu_custom_call.1} parent=59 // pred_check_branch
          %1467 = sbr.rel (%p1464) target = $region92
        $region91: #{tpu_custom_call.1} parent=59 // pred_region
          %v1468 = vld [vmem:[%s3] sm:$0x1]
          %v1469 = vmul.f32 %v1460, %v1460
          %v1470 = vsel %vm598, %v1469, 0.0
          %1471 = vadd.xlane.f32.xlu0 %v1470
          %v1472 = vpop.xlane.xlu0 %1471
          %v1473 = vmul.f32 %v1472, %v602
          %v1474 = vadd.f32 %v1473, 1e-06
          %v1475 = vrsqrt.pop %v1474
          %v1476 = vmul.f32 %v1460, %v1475
          %v1478 = vlaneseq
          %v1479 = vshrl.u32 %v1478, 7
          %v1480 = vsub.s32 0, %v1479
          %v1481 = vrot.slane %v1468, %v1480
          %v1483 = vmul.f32 %v1476, %v1481
          %1484 = vst.msk [vmem:[%s513] sm:$0xff] %vm598, %v1483
        $region92: #{tpu_custom_call.1} parent=59 // pred_fallthru
          _
        %s1485 = sand.u32 %s285, 1
        %s1486 = scalar_lea.sflag [#allocation6], %s1485
        %s1487 = sand.u32 %s285, 1
        %s1488 = smul.addr %s1487, 8
        %s1489 = scalar_lea.vmem [#allocation13], %s1488
        %s1490 = sand.u32 %s311, 1
        %s1491 = scalar_lea.sflag [#allocation15], %s1490
        %s1492 = sand.u32 %s311, 1
        %s1493 = smul.addr %s1492, 8
        %s1494 = scalar_lea.vmem [#allocation14], %s1493
        // Predicated region
        $region93: #{tpu_custom_call.1} parent=59 // pred_check
          %p1495 = pneg %p295
        $region94: #{tpu_custom_call.1} parent=59 // pred_check_branch
          %1497 = sbr.rel (%p1495) target = $region96
        $region95: #{tpu_custom_call.1} parent=59 // pred_region
          %s1499 = ssub.s32 128, 128
          %1500 = vsyncadd %s1486, %s1499
          %s1501 = smul.addr %s42, 2
          %s1502 = sadd.s32 %s41, %s1501
          %s1503 = smul.addr %s1502, 128
          %s1504 = scalar_lea.hbm %s10, %s1503
          %s1506 = sshll.u32 %s1489, 4
          %s1507 = int_to_ptr.vmem [resolvable:$true] %s1506
          %1509 = dma.vmem_to_hbm [thread:$0]  %s1507, 128, %s1504, %s1486
        $region96: #{tpu_custom_call.1} parent=59 // pred_fallthru
          _
        // Predicated region
        $region97: #{tpu_custom_call.1} parent=59 // pred_check
          %p1510 = pneg %p321
        $region98: #{tpu_custom_call.1} parent=59 // pred_check_branch
          %1512 = sbr.rel (%p1510) target = $region100
        $region99: #{tpu_custom_call.1} parent=59 // pred_region
          %s1514 = ssub.s32 128, 128
          %1515 = vsyncadd %s1491, %s1514
          %s1516 = smul.addr %s41, 128
          %s1517 = scalar_lea.hbm %s11, %s1516
          %s1519 = sshll.u32 %s1494, 4
          %s1520 = int_to_ptr.vmem [resolvable:$true] %s1519
          %1522 = dma.vmem_to_hbm [thread:$0]  %s1520, 128, %s1517, %s1491
        $region100: #{tpu_custom_call.1} parent=59 // pred_fallthru
          _
      $region60: #{tpu_custom_call.1} parent=5 // pred_fallthru
        _
      %p1523 = scmp.le.s32.totalorder 2, %s31
      // Predicated region
      $region101: #{tpu_custom_call.1} parent=5 // pred_check
        %p1524 = pneg %p1523
      $region102: #{tpu_custom_call.1} parent=5 // pred_check_branch
        %1526 = sbr.rel (%p1524) target = $region104
      $region103: #{tpu_custom_call.1} parent=5 // pred_region
        %s1527 = ssub.s32 %s31, 2
        // Predicated region
        $region105: #{tpu_custom_call.1} parent=103 // pred_check
          %p1528 = pneg %p301
        $region106: #{tpu_custom_call.1} parent=103 // pred_check_branch
          %1530 = sbr.rel (%p1528) target = $region108
        $region107: #{tpu_custom_call.1} parent=103 // pred_region
          %s1531 = sand.u32 %s286, 1
          %s1532 = scalar_lea.sflag [#allocation6], %s1531
          %s1533 = sand.u32 %s286, 1
          %s1534 = smul.addr %s1533, 8
          %s1535 = scalar_lea.vmem [#allocation13], %s1534
          %1536 = dma.done %s1532, 128
        $region108: #{tpu_custom_call.1} parent=103 // pred_fallthru
          _
        // Predicated region
        $region109: #{tpu_custom_call.1} parent=103 // pred_check
          %p1537 = pneg %p327
        $region110: #{tpu_custom_call.1} parent=103 // pred_check_branch
          %1539 = sbr.rel (%p1537) target = $region112
        $region111: #{tpu_custom_call.1} parent=103 // pred_region
          %s1540 = sand.u32 %s312, 1
          %s1541 = scalar_lea.sflag [#allocation15], %s1540
          %s1542 = sand.u32 %s312, 1
          %s1543 = smul.addr %s1542, 8
          %s1544 = scalar_lea.vmem [#allocation14], %s1543
          %1545 = dma.done %s1541, 128
        $region112: #{tpu_custom_call.1} parent=103 // pred_fallthru
          _
      $region104: #{tpu_custom_call.1} parent=5 // pred_fallthru
        _
    $region6: #{tpu_custom_call.1} parent=1 // loop_footer
      %s35 = sadd.s32 1, %s31
    $region7: #{tpu_custom_call.1} parent=1 // loop_footer_branch
      %30 = sbr.rel target = $region3
    $region8: #{tpu_custom_call.1} parent=1 // loop_exit
      _
    %1546 = vsyncpa [#allocation5], 1
    %s1547 = scalar_lea.sflag [#allocation5], 1
    %1548 = vsyncpa %s1547, 1
    %1549 = vsyncpa [#allocation8], 1
    %s1550 = scalar_lea.sflag [#allocation8], 1
    %1551 = vsyncpa %s1550, 1
    %1552 = vsyncpa [#allocation11], 1
    %1553 = vsyncpa [#allocation6], 1
    %s1554 = scalar_lea.sflag [#allocation6], 1
    %1555 = vsyncpa %s1554, 1
    %1556 = vsyncpa [#allocation15], 1
    %s1557 = scalar_lea.sflag [#allocation15], 1
    %1558 = vsyncpa %s1557, 1

</llo_original>
